<compile_context>
chip_gen: v5e
topology: v5e:2x2
jax: 0.10.0
libtpu: 0.0.40
codegen_flags: <defaults>
</compile_context>

<pallas_src>
import functools

import jax
import jax.numpy as jnp
from jax import lax
from jax.experimental import pallas as pl
from jax.experimental.pallas import tpu as pltpu


def _rup(x, m):
    return ((x + m - 1) // m) * m


# --------------------------------------------------------------------------- #
# Kernel 1: tiled matmul, bf16 operands, f32 accumulation, fused bias.
# Used for the three 1x1-conv projections (query / key / value).
# --------------------------------------------------------------------------- #
def _mm_kernel(x_ref, w_ref, b_ref, o_ref, acc_ref):
    @pl.when(pl.program_id(2) == 0)
    def _():
        acc_ref[...] = jnp.zeros_like(acc_ref)

    acc_ref[...] += jnp.dot(x_ref[...], w_ref[...],
                            preferred_element_type=jnp.float32)

    @pl.when(pl.program_id(2) == pl.num_programs(2) - 1)
    def _():
        o_ref[...] = (acc_ref[...] + b_ref[...]).astype(o_ref.dtype)


@functools.lru_cache(maxsize=None)
def _matmul_call(Mp, Kp, Np, tm, tn, tk, out_dtype):
    return pl.pallas_call(
        _mm_kernel,
        out_shape=jax.ShapeDtypeStruct((Mp, Np), jnp.dtype(out_dtype)),
        grid_spec=pltpu.PrefetchScalarGridSpec(
            num_scalar_prefetch=0,
            grid=(Mp // tm, Np // tn, Kp // tk),
            in_specs=[
                pl.BlockSpec((tm, tk), lambda i, j, k: (i, k)),
                pl.BlockSpec((tk, tn), lambda i, j, k: (k, j)),
                pl.BlockSpec((1, tn), lambda i, j, k: (0, j)),
            ],
            out_specs=pl.BlockSpec((tm, tn), lambda i, j, k: (i, j)),
            scratch_shapes=[pltpu.VMEM((tm, tn), jnp.float32)],
        ),
        compiler_params=pltpu.CompilerParams(
            dimension_semantics=("parallel", "parallel", "arbitrary")),
    )


def matmul_bias(x, w, b, out_dtype=jnp.bfloat16):
    """(M,K) @ (K,N) + b. bf16 operand tiles, f32 accumulator, fused bias."""
    M, K = x.shape
    _, N = w.shape
    # Cast BEFORE padding so the padded HBM streams are bf16 too.
    x = x.astype(jnp.bfloat16)
    w = w.astype(jnp.bfloat16)

    # tm capped at 256 so the i-axis keeps >=2 parallel steps for M>=512
    # (feeds both TensorCores on v7x); tn/tk go to 256 when padding allows.
    tm = min(256, _rup(M, 8))
    n128 = _rup(N, 128)
    tn = 256 if n128 % 256 == 0 else 128
    k128 = _rup(K, 128)
    tk = 256 if k128 % 256 == 0 else 128
    Mp, Kp, Np = _rup(M, tm), _rup(K, tk), _rup(N, tn)

    if (Mp, Kp) != (M, K):
        x = jnp.pad(x, ((0, Mp - M), (0, Kp - K)))
    if (Kp, Np) != (K, N):
        w = jnp.pad(w, ((0, Kp - K), (0, Np - N)))
    bp = b.astype(jnp.float32)
    if Np != N:
        bp = jnp.pad(bp, (0, Np - N))
    bp = bp.reshape(1, Np)

    out = _matmul_call(Mp, Kp, Np, tm, tn, tk,
                       jnp.dtype(out_dtype).name)(x, w, bp)
    return out[:M, :N]


# --------------------------------------------------------------------------- #
# Kernel 2: fused attention  (q.kT -> softmax -> att @ v -> gamma*out + x).
# Grid = (batch, query-tile). Output is lane-dense (tq, C).
# --------------------------------------------------------------------------- #
def _attn_kernel(q_ref, k_ref, v_ref, x_ref, g_ref, o_ref):
    q = q_ref[0]                                    # (tq, C8)  bf16
    k = k_ref[0]                                    # (N,  C8)  bf16
    v = v_ref[0]                                    # (N,  C)   bf16

    # energy[i, j] = sum_c q[i, c] * k[j, c]   (contract on C8; no transpose)
    e = lax.dot_general(q, k, (((1,), (1,)), ((), ())),
                        preferred_element_type=jnp.float32)       # (tq, N)
    e = e - jnp.max(e, axis=-1, keepdims=True)
    p = jnp.exp(e)
    inv = pl.reciprocal(jnp.sum(p, axis=-1, keepdims=True), approx=True)
    att = (p * inv).astype(v.dtype)                 # (tq, N)  bf16

    out = jnp.dot(att, v, preferred_element_type=jnp.float32)     # (tq, C)
    o_ref[0] = g_ref[0, 0] * out + x_ref[0]         # gamma*out + x  (f32)


@functools.lru_cache(maxsize=None)
def _attn_call(B, N, C8, C, tq):
    return pl.pallas_call(
        _attn_kernel,
        out_shape=jax.ShapeDtypeStruct((B, N, C), jnp.float32),
        grid_spec=pltpu.PrefetchScalarGridSpec(
            num_scalar_prefetch=0,
            grid=(B, N // tq),
            in_specs=[
                pl.BlockSpec((1, tq, C8), lambda b, i: (b, i, 0)),   # q tile
                pl.BlockSpec((1, N, C8), lambda b, i: (b, 0, 0)),    # full k
                pl.BlockSpec((1, N, C), lambda b, i: (b, 0, 0)),     # full v
                pl.BlockSpec((1, tq, C), lambda b, i: (b, i, 0)),    # residual x
                pl.BlockSpec((1, 1), lambda b, i: (0, 0)),           # gamma
            ],
            out_specs=pl.BlockSpec((1, tq, C), lambda b, i: (b, i, 0)),
        ),
        compiler_params=pltpu.CompilerParams(
            dimension_semantics=("parallel", "parallel")),
    )


def _choose_tq(N):
    if N <= 2048:
        return N
    for t in (2048, 1024, 512, 256, 128):
        if N % t == 0:
            return t
    return N


# --------------------------------------------------------------------------- #
# SelfAttention forward (matches the PyTorch module semantics).
# --------------------------------------------------------------------------- #
def self_attention(params, x_nchw):
    B, C, H, W = x_nchw.shape
    N = H * W
    C8 = C // 8

    # NCHW -> NHWC -> (B*N, C): channel axis last (lane-dense).
    x_nhwc = jnp.transpose(x_nchw, (0, 2, 3, 1)).astype(jnp.float32)
    x_flat = x_nhwc.reshape(B * N, C)

    # 1x1 convs as matmuls (weights already stored as (Cin, Cout)).
    q = matmul_bias(x_flat, params['wq'], params['bq']).reshape(B, N, C8)
    k = matmul_bias(x_flat, params['wk'], params['bk']).reshape(B, N, C8)
    v = matmul_bias(x_flat, params['wv'], params['bv']).reshape(B, N, C)

    tq = _choose_tq(N)
    gamma = params['gamma'].reshape(1, 1).astype(jnp.float32)
    y = _attn_call(B, N, C8, C, tq)(q, k, v, x_nhwc.reshape(B, N, C), gamma)

    return jnp.transpose(y.reshape(B, H, W, C), (0, 3, 1, 2))     # back to NCHW


# Pure-JAX f32 reference that mirrors the torch forward line-by-line.
def self_attention_ref(params, x_nchw):
    B, C, H, W = x_nchw.shape
    N = H * W
    x = x_nchw.astype(jnp.float32)
    xf = x.reshape(B, C, N)
    q = jnp.einsum('bcn,cd->bnd', xf, params['wq']) + params['bq']            # (B,N,C8)
    k = jnp.einsum('bcn,cd->bdn', xf, params['wk']) + params['bk'][None, :, None]
    energy = jnp.einsum('bnd,bdm->bnm', q, k)
    att = jax.nn.softmax(energy, axis=-1)
    v = jnp.einsum('bcn,cd->bdn', xf, params['wv']) + params['bv'][None, :, None]
    out = jnp.einsum('bdn,bmn->bdm', v, att)                                  # v @ att^T
    out = out.reshape(B, C, H, W)
    return params['gamma'].reshape(()) * out + x


def build_params(key, in_channels):
    C = in_channels
    C8 = C // 8
    ks = jax.random.split(key, 6)
    sq = 0.05                 # modest init keeps softmax logits well conditioned
    sv = 1.0 / (C ** 0.5)
    return {
        # Conv2d(k=1) weights stored pre-transposed as (Cin, Cout) matmul
        # operands (== torch (Cout, Cin, 1, 1) transposed), per perf review.
        'wq': sq * jax.random.normal(ks[0], (C, C8), jnp.float32),
        'bq': 0.01 * jax.random.normal(ks[1], (C8,), jnp.float32),
        'wk': sq * jax.random.normal(ks[2], (C, C8), jnp.float32),
        'bk': 0.01 * jax.random.normal(ks[3], (C8,), jnp.float32),
        'wv': sv * jax.random.normal(ks[4], (C, C), jnp.float32),
        'bv': 0.01 * jax.random.normal(ks[5], (C,), jnp.float32),
        # torch init is zeros(1); use a non-zero value so the attention branch
        # actually contributes in the demo (forward semantics hold for any gamma).
        'gamma': jnp.full((1,), 0.5, jnp.float32),
    }


# --------------------------------------------------------------------------- #
if __name__ == "__main__":
    key = jax.random.PRNGKey(0)
    kx, kp = jax.random.split(key)

    # in_channels must be >= 8 (query/key project to C // 8 channels).
    B, C, H, W = 2, 128, 16, 16
    x = jax.random.normal(kx, (B, C, H, W), jnp.float32)
    params = build_params(kp, C)

    fwd = jax.jit(self_attention)
    out = jax.block_until_ready(fwd(params, x))

    assert out.shape == (B, C, H, W), out.shape
    assert bool(jnp.all(jnp.isfinite(out)))

    # Correctness vs f32 reference (kernel path uses bf16 operands + approx
    # reciprocal, so allow a small tolerance).
    ref = self_attention_ref(params, x)
    max_err = float(jnp.max(jnp.abs(out - ref)))
    assert max_err < 1e-1, max_err

    print("KERNEL_OK")
</pallas_src>

<mosaic_0001>
module attributes {stable_mosaic.version = 11 : i64} {
  func.func @_mm_kernel(%arg0: i32, %arg1: i32, %arg2: i32, %arg3: memref<256x128xbf16, #tpu.memory_space<vmem>>, %arg4: memref<128x128xbf16, #tpu.memory_space<vmem>>, %arg5: memref<1x128xf32, #tpu.memory_space<vmem>>, %arg6: memref<256x128xbf16, #tpu.memory_space<vmem>>, %arg7: memref<256x128xf32, #tpu.memory_space<vmem>>) attributes {dimension_semantics = [#tpu.dimension_semantics<parallel>, #tpu.dimension_semantics<parallel>, #tpu.dimension_semantics<arbitrary>], iteration_bounds = array<i64: 2, 1, 1>, scalar_prefetch = 0 : i64, scratch_operands = 1 : i64, tpu.core_type = #tpu.core_type<tc>, window_params = [{transform_indices = @transform_0, window_bounds = array<i64: 256, 128>}, {transform_indices = @transform_1, window_bounds = array<i64: 128, 128>}, {transform_indices = @transform_2, window_bounds = array<i64: 1, 128>}, {transform_indices = @transform_3, window_bounds = array<i64: 256, 128>}]} {
    %c0_i32 = arith.constant 0 : i32
    %0 = arith.cmpi eq, %arg2, %c0_i32 : i32
    %1 = arith.extui %0 : i1 to i32
    %c0_i32_0 = arith.constant 0 : i32
    %2 = arith.cmpi ne, %1, %c0_i32_0 : i32
    scf.if %2 {
      %cst_10 = arith.constant 0.000000e+00 : f32
      %12 = vector.broadcast %cst_10 : f32 to vector<256x128xf32>
      %c0_11 = arith.constant 0 : index
      %c0_12 = arith.constant 0 : index
      %13 = vector.load %arg7[%c0_11, %c0_12] : memref<256x128xf32, #tpu.memory_space<vmem>>, vector<256x128xf32>
      tpu.vector_store %arg7[%c0_11, %c0_12], %12 {strides = array<i32>} : memref<256x128xf32, #tpu.memory_space<vmem>>, vector<256x128xf32>,
    } else {
    }
    %c0 = arith.constant 0 : index
    %c0_1 = arith.constant 0 : index
    %3 = vector.load %arg7[%c0, %c0_1] : memref<256x128xf32, #tpu.memory_space<vmem>>, vector<256x128xf32>
    %c0_2 = arith.constant 0 : index
    %c0_3 = arith.constant 0 : index
    %4 = vector.load %arg3[%c0_2, %c0_3] : memref<256x128xbf16, #tpu.memory_space<vmem>>, vector<256x128xbf16>
    %c0_4 = arith.constant 0 : index
    %c0_5 = arith.constant 0 : index
    %5 = vector.load %arg4[%c0_4, %c0_5] : memref<128x128xbf16, #tpu.memory_space<vmem>>, vector<128x128xbf16>
    %cst = arith.constant dense<0.000000e+00> : vector<256x128xf32>
    %6 = tpu.matmul %4, %5, %cst {dimension_numbers = #tpu.dot_dimension_numbers<[1], [0], [0], [1], [0, 0, 1, 1], [], []>} : vector<256x128xbf16>, vector<128x128xbf16>, vector<256x128xf32> -> vector<256x128xf32>
    %7 = arith.addf %3, %6 : vector<256x128xf32>
    %c0_6 = arith.constant 0 : index
    %c0_7 = arith.constant 0 : index
    %8 = vector.load %arg7[%c0_6, %c0_7] : memref<256x128xf32, #tpu.memory_space<vmem>>, vector<256x128xf32>
    tpu.vector_store %arg7[%c0_6, %c0_7], %7 {strides = array<i32>} : memref<256x128xf32, #tpu.memory_space<vmem>>, vector<256x128xf32>,
    %c0_i32_8 = arith.constant 0 : i32
    %9 = arith.cmpi eq, %arg2, %c0_i32_8 : i32
    %10 = arith.extui %9 : i1 to i32
    %c0_i32_9 = arith.constant 0 : i32
    %11 = arith.cmpi ne, %10, %c0_i32_9 : i32
    scf.if %11 {
      %c0_10 = arith.constant 0 : index
      %c0_11 = arith.constant 0 : index
      %12 = vector.load %arg7[%c0_10, %c0_11] : memref<256x128xf32, #tpu.memory_space<vmem>>, vector<256x128xf32>
      %c0_12 = arith.constant 0 : index
      %c0_13 = arith.constant 0 : index
      %13 = vector.load %arg5[%c0_12, %c0_13] : memref<1x128xf32, #tpu.memory_space<vmem>>, vector<1x128xf32>
      %14 = vector.broadcast %13 : vector<1x128xf32> to vector<256x128xf32>
      %15 = arith.addf %12, %14 : vector<256x128xf32>
      %16 = arith.truncf %15 : vector<256x128xf32> to vector<256x128xbf16>
      %c0_14 = arith.constant 0 : index
      %c0_15 = arith.constant 0 : index
      %17 = vector.load %arg6[%c0_14, %c0_15] : memref<256x128xbf16, #tpu.memory_space<vmem>>, vector<256x128xbf16>
      tpu.vector_store %arg6[%c0_14, %c0_15], %16 {strides = array<i32>} : memref<256x128xbf16, #tpu.memory_space<vmem>>, vector<256x128xbf16>,
    } else {
    }
    return
  }
  func.func @transform_0(%arg0: i32, %arg1: i32, %arg2: i32) -> (i32, i32) {
    %c0_i32 = arith.constant 0 : i32
    return %arg0, %arg2 : i32, i32
  }
  func.func @transform_1(%arg0: i32, %arg1: i32, %arg2: i32) -> (i32, i32) {
    %c0_i32 = arith.constant 0 : i32
    return %arg2, %arg1 : i32, i32
  }
  func.func @transform_2(%arg0: i32, %arg1: i32, %arg2: i32) -> (i32, i32) {
    %c0_i32 = arith.constant 0 : i32
    %c0_i32_0 = arith.constant 0 : i32
    return %c0_i32, %arg1 : i32, i32
  }
  func.func @transform_3(%arg0: i32, %arg1: i32, %arg2: i32) -> (i32, i32) {
    %c0_i32 = arith.constant 0 : i32
    return %arg0, %arg1 : i32, i32
  }
}

module attributes {stable_mosaic.version = 11 : i64} {
  func.func @_attn_kernel(%arg0: i32, %arg1: i32, %arg2: memref<1x256x16xbf16, #tpu.memory_space<vmem>>, %arg3: memref<1x256x16xbf16, #tpu.memory_space<vmem>>, %arg4: memref<1x256x128xbf16, #tpu.memory_space<vmem>>, %arg5: memref<1x256x128xf32, #tpu.memory_space<vmem>>, %arg6: memref<1x1xf32, #tpu.memory_space<vmem>>, %arg7: memref<1x256x128xf32, #tpu.memory_space<vmem>>) attributes {dimension_semantics = [#tpu.dimension_semantics<parallel>, #tpu.dimension_semantics<parallel>], iteration_bounds = array<i64: 2, 1>, scalar_prefetch = 0 : i64, scratch_operands = 0 : i64, tpu.core_type = #tpu.core_type<tc>, window_params = [{transform_indices = @transform_0, window_bounds = array<i64: 1, 256, 16>}, {transform_indices = @transform_1, window_bounds = array<i64: 1, 256, 16>}, {transform_indices = @transform_2, window_bounds = array<i64: 1, 256, 128>}, {transform_indices = @transform_3, window_bounds = array<i64: 1, 256, 128>}, {pipeline_mode = #tpu.pipeline_mode<synchronous>, transform_indices = @transform_4, window_bounds = array<i64: 1, 1>}, {transform_indices = @transform_5, window_bounds = array<i64: 1, 256, 128>}]} {
    %c0 = arith.constant 0 : index
    %c0_0 = arith.constant 0 : index
    %c0_1 = arith.constant 0 : index
    %0 = vector.load %arg2[%c0, %c0_0, %c0_1] : memref<1x256x16xbf16, #tpu.memory_space<vmem>>, vector<1x256x16xbf16>
    %1 = vector.shape_cast %0 : vector<1x256x16xbf16> to vector<256x16xbf16>
    %c0_2 = arith.constant 0 : index
    %c0_3 = arith.constant 0 : index
    %c0_4 = arith.constant 0 : index
    %2 = vector.load %arg3[%c0_2, %c0_3, %c0_4] : memref<1x256x16xbf16, #tpu.memory_space<vmem>>, vector<1x256x16xbf16>
    %3 = vector.shape_cast %2 : vector<1x256x16xbf16> to vector<256x16xbf16>
    %c0_5 = arith.constant 0 : index
    %c0_6 = arith.constant 0 : index
    %c0_7 = arith.constant 0 : index
    %4 = vector.load %arg4[%c0_5, %c0_6, %c0_7] : memref<1x256x128xbf16, #tpu.memory_space<vmem>>, vector<1x256x128xbf16>
    %5 = vector.shape_cast %4 : vector<1x256x128xbf16> to vector<256x128xbf16>
    %cst = arith.constant dense<0.000000e+00> : vector<256x256xf32>
    %6 = tpu.matmul %1, %3, %cst {dimension_numbers = #tpu.dot_dimension_numbers<[1], [1], [0], [0], [0, 0, 1, 0], [], []>} : vector<256x16xbf16>, vector<256x16xbf16>, vector<256x256xf32> -> vector<256x256xf32>
    %cst_8 = arith.constant dense<0xFF800000> : vector<256xf32>
    %7 = vector.multi_reduction <maximumf>, %6, %cst_8 [1] : vector<256x256xf32> to vector<256xf32>
    %8 = vector.shape_cast %7 : vector<256xf32> to vector<256x1xf32>
    %9 = vector.broadcast %8 : vector<256x1xf32> to vector<256x256xf32>
    %10 = arith.subf %6, %9 : vector<256x256xf32>
    %11 = math.exp %10 : vector<256x256xf32>
    %cst_9 = arith.constant dense<0.000000e+00> : vector<256xf32>
    %12 = vector.multi_reduction <add>, %11, %cst_9 [1] : vector<256x256xf32> to vector<256xf32>
    %13 = vector.shape_cast %12 : vector<256xf32> to vector<256x1xf32>
    %14 = tpu.reciprocal %13 {approx = true} : vector<256x1xf32> -> vector<256x1xf32>
    %15 = vector.broadcast %14 : vector<256x1xf32> to vector<256x256xf32>
    %16 = arith.mulf %11, %15 : vector<256x256xf32>
    %17 = arith.truncf %16 : vector<256x256xf32> to vector<256x256xbf16>
    %cst_10 = arith.constant dense<0.000000e+00> : vector<256x128xf32>
    %18 = tpu.matmul %17, %5, %cst_10 {dimension_numbers = #tpu.dot_dimension_numbers<[1], [0], [0], [1], [0, 0, 1, 1], [], []>} : vector<256x256xbf16>, vector<256x128xbf16>, vector<256x128xf32> -> vector<256x128xf32>
    %c0_11 = arith.constant 0 : index
    %c0_12 = arith.constant 0 : index
    %19 = vector.load %arg6[%c0_11, %c0_12] : memref<1x1xf32, #tpu.memory_space<vmem>>, vector<1x1xf32>
    %20 = vector.extract %19[0, 0] : f32 from vector<1x1xf32>
    %21 = vector.broadcast %20 : f32 to vector<256x128xf32>
    %22 = arith.mulf %21, %18 : vector<256x128xf32>
    %c0_13 = arith.constant 0 : index
    %c0_14 = arith.constant 0 : index
    %c0_15 = arith.constant 0 : index
    %23 = vector.load %arg5[%c0_13, %c0_14, %c0_15] : memref<1x256x128xf32, #tpu.memory_space<vmem>>, vector<1x256x128xf32>
    %24 = vector.shape_cast %23 : vector<1x256x128xf32> to vector<256x128xf32>
    %25 = arith.addf %22, %24 : vector<256x128xf32>
    %c0_16 = arith.constant 0 : index
    %c0_17 = arith.constant 0 : index
    %c0_18 = arith.constant 0 : index
    %26 = vector.load %arg7[%c0_16, %c0_17, %c0_18] : memref<1x256x128xf32, #tpu.memory_space<vmem>>, vector<1x256x128xf32>
    %27 = vector.shape_cast %26 : vector<1x256x128xf32> to vector<256x128xf32>
    %28 = vector.shape_cast %25 : vector<256x128xf32> to vector<1x256x128xf32>
    tpu.vector_store %arg7[%c0_16, %c0_17, %c0_18], %28 {strides = array<i32>} : memref<1x256x128xf32, #tpu.memory_space<vmem>>, vector<1x256x128xf32>,
    return
  }
  func.func @transform_0(%arg0: i32, %arg1: i32) -> (i32, i32, i32) {
    %c0_i32 = arith.constant 0 : i32
    %c0_i32_0 = arith.constant 0 : i32
    return %arg0, %arg1, %c0_i32 : i32, i32, i32
  }
  func.func @transform_1(%arg0: i32, %arg1: i32) -> (i32, i32, i32) {
    %c0_i32 = arith.constant 0 : i32
    %c0_i32_0 = arith.constant 0 : i32
    %c0_i32_1 = arith.constant 0 : i32
    return %arg0, %c0_i32, %c0_i32_0 : i32, i32, i32
  }
  func.func @transform_2(%arg0: i32, %arg1: i32) -> (i32, i32, i32) {
    %c0_i32 = arith.constant 0 : i32
    %c0_i32_0 = arith.constant 0 : i32
    %c0_i32_1 = arith.constant 0 : i32
    return %arg0, %c0_i32, %c0_i32_0 : i32, i32, i32
  }
  func.func @transform_3(%arg0: i32, %arg1: i32) -> (i32, i32, i32) {
    %c0_i32 = arith.constant 0 : i32
    %c0_i32_0 = arith.constant 0 : i32
    return %arg0, %arg1, %c0_i32 : i32, i32, i32
  }
  func.func @transform_4(%arg0: i32, %arg1: i32) -> (i32, i32) {
    %c0_i32 = arith.constant 0 : i32
    %c0_i32_0 = arith.constant 0 : i32
    %c0_i32_1 = arith.constant 0 : i32
    return %c0_i32, %c0_i32_0 : i32, i32
  }
  func.func @transform_5(%arg0: i32, %arg1: i32) -> (i32, i32, i32) {
    %c0_i32 = arith.constant 0 : i32
    %c0_i32_0 = arith.constant 0 : i32
    return %arg0, %arg1, %c0_i32 : i32, i32, i32
  }
}

</mosaic_0001>

<llo_original>
// kernel: self_attention.5
$region0: #{self_attention.5}
  #allocation0 [shape = 'u32[]', space=smem, size = 0x4, offset = 0x4, fixed_abs, tag = 'smem constant byte address 0x4 - core index']
  #allocation1 [shape = 'u32[72,128]{1,0:T(1,128)}', space=vmem, size = 0x9000, scoped, tag = 'internal scratch']
  #allocation2 [shape = 'f32[256,128]{1,0:T(8,128)}', space=vmem, size = 0x20000, scoped, tag = 'scratch operand']
  %s0 = inlined_call_operand.vmem [shape: bf16[512,128], index: 0, kind: input, shape index: {}]
  %s1 = inlined_call_operand.vmem [shape: bf16[128,128], index: 1, kind: input, shape index: {}]
  %s2 = inlined_call_operand.vmem [shape: f32[1,128], index: 2, kind: input, shape index: {}]
  %s3 = inlined_call_operand.vmem [shape: bf16[512,128], index: 3, kind: output, shape index: {}]
  %s4 = sld [smem:[#allocation0]]
  $region53: #{self_attention.5} parent=0
    _
  %s6 = ssub.s32 1, %s4
  %s7 = scalar_select 0, %s6, %s4
  loop: start=0, step=1, limit=4
  $region2: #{self_attention.5} parent=0 // loop_pre_header
    _
  $region3: #{self_attention.5} parent=0 // loop_header
    %s9 = sphi 0, %s13
    %p10 = scmp.ge.s32.totalorder %s9, 4
    %s16 = sphi 0, %s35
    %s17 = sphi 0, %s31
    %s18 = sphi 0, %s27
    %s19 = sphi 0, %s16
    %s20 = sphi 0, %s17
    %s21 = sphi 0, %s18
    %s22 = sphi 0, %s19
    %s23 = sphi 0, %s20
    %s24 = sphi 0, %s21
    %s40 = sphi 0, %s42
    %s43 = sphi 0, %s40
    %s44 = sphi 0, %s43
    %s60 = sphi 0, %s44
    %s68 = sphi 0, %s70
    %s71 = sphi 0, %s68
    %s72 = sphi 0, %s71
    %s88 = sphi 0, %s72
    %s94 = sphi 0, %s96
    %s97 = sphi 0, %s94
    %s98 = sphi 0, %s97
    %s114 = sphi 0, %s98
    %s122 = sphi 0, %s124
    %s125 = sphi 0, %s122
    %s126 = sphi 0, %s125
    %s142 = sphi 0, %s126
  $region4: #{self_attention.5} parent=0 // loop_header_branch
    %12 = sbr.rel (%p10) target = $region8
  $region5: #{self_attention.5} parent=0 // loop_body
    %s14 = ssub.s32 %s9, 1
    %s15 = ssub.s32 %s9, 2
    %s25 = sadd.s32 1, %s18
    %p26 = scmp.ge.s32.totalorder %s25, 1
    %s27 = scalar_select %p26, 0, %s25
    %s28 = sadd.s32 1, %s17
    %s29 = scalar_select %p26, %s28, %s17
    %p30 = scmp.ge.s32.totalorder %s29, 1
    %s31 = scalar_select %p30, 0, %s29
    %s32 = sadd.s32 1, %s16
    %s33 = scalar_select %p30, %s32, %s16
    %p34 = scmp.ge.s32.totalorder %s33, 2
    %s35 = scalar_select %p34, 0, %s33
    %s36 = ssub.s32 %s16, %s35
    %s37 = ssub.s32 %s18, %s27
    %s38 = sor.u32 %s36, %s37
    %p39 = scmp.eq.s32.totalorder %s38, 0
    %s41 = sadd.s32 %s40, 1
    %s42 = scalar_select %p39, %s40, %s41
    %p45 = pneg %p39
    %p46 = scmp.eq.s32.totalorder %s9, 1
    %p47 = por %p45, %p46
    %p48 = scmp.ne.s32.totalorder %s40, %s43
    %p49 = scmp.eq.s32.totalorder %s9, 0
    %p50 = por %p48, %p49
    %p51 = scmp.ne.s32.totalorder %s40, %s43
    %p52 = scmp.eq.s32.totalorder %s14, 1
    %p53 = por %p51, %p52
    %p54 = scmp.ne.s32.totalorder %s43, %s44
    %p55 = scmp.eq.s32.totalorder %s14, 0
    %p56 = por %p54, %p55
    %p57 = scmp.ne.s32.totalorder %s43, %s44
    %p58 = scmp.eq.s32.totalorder %s15, 1
    %p59 = por %p57, %p58
    %p61 = scmp.ne.s32.totalorder %s44, %s60
    %p62 = scmp.eq.s32.totalorder %s15, 0
    %p63 = por %p61, %p62
    %s64 = ssub.s32 %s18, %s27
    %s65 = ssub.s32 %s17, %s31
    %s66 = sor.u32 %s64, %s65
    %p67 = scmp.eq.s32.totalorder %s66, 0
    %s69 = sadd.s32 %s68, 1
    %s70 = scalar_select %p67, %s68, %s69
    %p73 = pneg %p67
    %p74 = scmp.eq.s32.totalorder %s9, 1
    %p75 = por %p73, %p74
    %p76 = scmp.ne.s32.totalorder %s68, %s71
    %p77 = scmp.eq.s32.totalorder %s9, 0
    %p78 = por %p76, %p77
    %p79 = scmp.ne.s32.totalorder %s68, %s71
    %p80 = scmp.eq.s32.totalorder %s14, 1
    %p81 = por %p79, %p80
    %p82 = scmp.ne.s32.totalorder %s71, %s72
    %p83 = scmp.eq.s32.totalorder %s14, 0
    %p84 = por %p82, %p83
    %p85 = scmp.ne.s32.totalorder %s71, %s72
    %p86 = scmp.eq.s32.totalorder %s15, 1
    %p87 = por %p85, %p86
    %p89 = scmp.ne.s32.totalorder %s72, %s88
    %p90 = scmp.eq.s32.totalorder %s15, 0
    %p91 = por %p89, %p90
    %s92 = ssub.s32 %s17, %s31
    %p93 = scmp.eq.s32.totalorder %s92, 0
    %s95 = sadd.s32 %s94, 1
    %s96 = scalar_select %p93, %s94, %s95
    %p99 = pneg %p93
    %p100 = scmp.eq.s32.totalorder %s9, 1
    %p101 = por %p99, %p100
    %p102 = scmp.ne.s32.totalorder %s94, %s97
    %p103 = scmp.eq.s32.totalorder %s9, 0
    %p104 = por %p102, %p103
    %p105 = scmp.ne.s32.totalorder %s94, %s97
    %p106 = scmp.eq.s32.totalorder %s14, 1
    %p107 = por %p105, %p106
    %p108 = scmp.ne.s32.totalorder %s97, %s98
    %p109 = scmp.eq.s32.totalorder %s14, 0
    %p110 = por %p108, %p109
    %p111 = scmp.ne.s32.totalorder %s97, %s98
    %p112 = scmp.eq.s32.totalorder %s15, 1
    %p113 = por %p111, %p112
    %p115 = scmp.ne.s32.totalorder %s98, %s114
    %p116 = scmp.eq.s32.totalorder %s15, 0
    %p117 = por %p115, %p116
    %s118 = ssub.s32 %s16, %s35
    %s119 = ssub.s32 %s17, %s31
    %s120 = sor.u32 %s118, %s119
    %p121 = scmp.eq.s32.totalorder %s120, 0
    %s123 = sadd.s32 %s122, 1
    %s124 = scalar_select %p121, %s122, %s123
    %p127 = pneg %p121
    %p128 = scmp.eq.s32.totalorder %s9, 1
    %p129 = por %p127, %p128
    %p130 = scmp.ne.s32.totalorder %s122, %s125
    %p131 = scmp.eq.s32.totalorder %s9, 0
    %p132 = por %p130, %p131
    %p133 = scmp.ne.s32.totalorder %s122, %s125
    %p134 = scmp.eq.s32.totalorder %s14, 1
    %p135 = por %p133, %p134
    %p136 = scmp.ne.s32.totalorder %s125, %s126
    %p137 = scmp.eq.s32.totalorder %s14, 0
    %p138 = por %p136, %p137
    %p139 = scmp.ne.s32.totalorder %s125, %s126
    %p140 = scmp.eq.s32.totalorder %s15, 1
    %p141 = por %p139, %p140
    %p143 = scmp.ne.s32.totalorder %s126, %s142
    %p144 = scmp.eq.s32.totalorder %s15, 0
    %p145 = por %p143, %p144
    %p146 = scmp.le.s32.totalorder 1, %s9
    %p147 = scmp.lt.s32.totalorder %s9, 3
    %p148 = pnand %p146, %p147
    %p149 = pneg %p148
    // Predicated region
    $region9: #{self_attention.5} parent=5 // pred_check
      _
    $region10: #{self_attention.5} parent=5 // pred_check_branch
      %151 = sbr.rel (%p148) target = $region12
    $region11: #{self_attention.5} parent=5 // pred_region
      %s152 = ssub.s32 %s9, 1
      // Predicated region
      $region13: #{self_attention.5} parent=11 // pred_check
        %p153 = pneg %p84
      $region14: #{self_attention.5} parent=11 // pred_check_branch
        %155 = sbr.rel (%p153) target = $region16
      $region15: #{self_attention.5} parent=11 // pred_region
        %s156 = smul.u32 16, %s21
        %p157 = scmp.lt.s32.totalorder %s156, 15
        %s158 = scalar_select %p157, %s156, 15
        %p159 = scmp.lt.s32.totalorder %s20, 0
        %s160 = scalar_select %p159, %s20, 0
        %s161 = sadd.s32 %s160, %s158
        %s162 = smul.addr %s161, 4
        %s163 = scalar_lea.vmem %s1, %s162
        %s164 = smul.u32 16, %s21
      $region16: #{self_attention.5} parent=11 // pred_fallthru
        _
      // Predicated region
      $region17: #{self_attention.5} parent=11 // pred_check
        %p165 = pneg %p110
      $region18: #{self_attention.5} parent=11 // pred_check_branch
        %167 = sbr.rel (%p165) target = $region20
      $region19: #{self_attention.5} parent=11 // pred_region
        %p168 = scmp.lt.s32.totalorder %s20, 0
        %s169 = scalar_select %p168, %s20, 0
        %s170 = scalar_lea.vmem %s2, %s169
      $region20: #{self_attention.5} parent=11 // pred_fallthru
        _
    $region12: #{self_attention.5} parent=5 // pred_fallthru
      _
    %p171 = scmp.lt.s32.totalorder %s9, 2
    // Predicated region
    $region21: #{self_attention.5} parent=5 // pred_check
      %p172 = pneg %p171
    $region22: #{self_attention.5} parent=5 // pred_check_branch
      %174 = sbr.rel (%p172) target = $region24
    $region23: #{self_attention.5} parent=5 // pred_region
      // Predicated region
      $region25: #{self_attention.5} parent=23 // pred_check
        %p175 = pneg %p50
      $region26: #{self_attention.5} parent=23 // pred_check_branch
        %177 = sbr.rel (%p175) target = $region28
      $region27: #{self_attention.5} parent=23 // pred_region
        %s178 = smul.u32 32, %s16
        %p179 = scmp.lt.s32.totalorder %s178, 63
        %s180 = scalar_select %p179, %s178, 63
        %p181 = scmp.lt.s32.totalorder %s18, 0
        %s182 = scalar_select %p181, %s18, 0
        %s183 = sadd.s32 %s182, %s180
        %s184 = smul.addr %s183, 4
        %s185 = scalar_lea.vmem %s0, %s184
        %s186 = smul.u32 32, %s16
      $region28: #{self_attention.5} parent=23 // pred_fallthru
        _
    $region24: #{self_attention.5} parent=5 // pred_fallthru
      _
    %p187 = scmp.le.s32.totalorder 1, %s9
    %p188 = scmp.lt.s32.totalorder %s9, 3
    %p189 = pnand %p187, %p188
    %p190 = pneg %p189
    // Predicated region
    $region29: #{self_attention.5} parent=5 // pred_check
      _
    $region30: #{self_attention.5} parent=5 // pred_check_branch
      %192 = sbr.rel (%p189) target = $region32
    $region31: #{self_attention.5} parent=5 // pred_region
      %s193 = ssub.s32 %s9, 1
      %s194 = smul.u32 32, %s19
      %p195 = scmp.lt.s32.totalorder %s194, 63
      %s196 = scalar_select %p195, %s194, 63
      %p197 = scmp.lt.s32.totalorder %s21, 0
      %s198 = scalar_select %p197, %s21, 0
      %s199 = sadd.s32 %s198, %s196
      %s200 = smul.addr %s199, 4
      %s201 = scalar_lea.vmem %s0, %s200
      %p202 = pneg %p56
      %p203 = pneg %p53
      %s204 = smul.u32 16, %s21
      %p205 = scmp.lt.s32.totalorder %s204, 15
      %s206 = scalar_select %p205, %s204, 15
      %p207 = scmp.lt.s32.totalorder %s20, 0
      %s208 = scalar_select %p207, %s20, 0
      %s209 = sadd.s32 %s208, %s206
      %s210 = smul.addr %s209, 4
      %s211 = scalar_lea.vmem %s1, %s210
      %p212 = pneg %p84
      %p213 = pneg %p81
      %p214 = scmp.lt.s32.totalorder %s20, 0
      %s215 = scalar_select %p214, %s20, 0
      %s216 = scalar_lea.vmem %s2, %s215
      %p217 = pneg %p110
      %p218 = pneg %p107
      %p219 = pneg %p138
      %p220 = pneg %p135
      %s221 = smul.u32 32, %s19
      %p222 = scmp.lt.s32.totalorder %s221, 63
      %s223 = scalar_select %p222, %s221, 63
      %p224 = scmp.lt.s32.totalorder %s20, 0
      %s225 = scalar_select %p224, %s20, 0
      %s226 = sadd.s32 %s225, %s223
      %s227 = smul.addr %s226, 4
      %s228 = scalar_lea.vmem %s3, %s227
      %s229 = smul.u32 32, %s19
      %p230 = scmp.lt.s32.totalorder %s229, 63
      %s231 = scalar_select %p230, %s229, 63
      %p232 = scmp.lt.s32.totalorder %s21, 0
      %s233 = scalar_select %p232, %s21, 0
      %s234 = sadd.s32 %s233, %s231
      %s235 = smul.addr %s234, 4
      %s236 = scalar_lea.vmem %s0, %s235
      %s237 = smul.u32 32, %s19
      %s238 = smul.u32 16, %s21
      %p239 = scmp.lt.s32.totalorder %s238, 15
      %s240 = scalar_select %p239, %s238, 15
      %p241 = scmp.lt.s32.totalorder %s20, 0
      %s242 = scalar_select %p241, %s20, 0
      %s243 = sadd.s32 %s242, %s240
      %s244 = smul.addr %s243, 4
      %s245 = scalar_lea.vmem %s1, %s244
      %s246 = smul.u32 16, %s21
      %p247 = scmp.lt.s32.totalorder %s20, 0
      %s248 = scalar_select %p247, %s20, 0
      %s249 = scalar_lea.vmem %s2, %s248
      %s250 = smul.u32 32, %s19
      %p251 = scmp.lt.s32.totalorder %s250, 63
      %s252 = scalar_select %p251, %s250, 63
      %p253 = scmp.lt.s32.totalorder %s20, 0
      %s254 = scalar_select %p253, %s20, 0
      %s255 = sadd.s32 %s254, %s252
      %s256 = smul.addr %s255, 4
      %s257 = scalar_lea.vmem %s3, %s256
      %s258 = smul.u32 32, %s19
      %p259 = scmp.eq.s32.totalorder %s21, 0
      // Predicated region
      $region33: #{self_attention.5} parent=31 // pred_check
        %p260 = pneg %p259
      $region34: #{self_attention.5} parent=31 // pred_check_branch
        %262 = sbr.rel (%p260) target = $region36
      $region35: #{self_attention.5} parent=31 // pred_region
        %263 = vst [vmem:[#allocation2] sm:$0xff] 0.0
        %264 = vst [vmem:[#allocation2 + $0x8] sm:$0xff] 0.0
        %265 = vst [vmem:[#allocation2 + $0x10] sm:$0xff] 0.0
        %266 = vst [vmem:[#allocation2 + $0x18] sm:$0xff] 0.0
        %267 = vst [vmem:[#allocation2 + $0x20] sm:$0xff] 0.0
        %268 = vst [vmem:[#allocation2 + $0x28] sm:$0xff] 0.0
        %269 = vst [vmem:[#allocation2 + $0x30] sm:$0xff] 0.0
        %270 = vst [vmem:[#allocation2 + $0x38] sm:$0xff] 0.0
        %271 = vst [vmem:[#allocation2 + $0x40] sm:$0xff] 0.0
        %272 = vst [vmem:[#allocation2 + $0x48] sm:$0xff] 0.0
        %273 = vst [vmem:[#allocation2 + $0x50] sm:$0xff] 0.0
        %274 = vst [vmem:[#allocation2 + $0x58] sm:$0xff] 0.0
        %275 = vst [vmem:[#allocation2 + $0x60] sm:$0xff] 0.0
        %276 = vst [vmem:[#allocation2 + $0x68] sm:$0xff] 0.0
        %277 = vst [vmem:[#allocation2 + $0x70] sm:$0xff] 0.0
        %278 = vst [vmem:[#allocation2 + $0x78] sm:$0xff] 0.0
        %279 = vst [vmem:[#allocation2 + $0x80] sm:$0xff] 0.0
        %280 = vst [vmem:[#allocation2 + $0x88] sm:$0xff] 0.0
        %281 = vst [vmem:[#allocation2 + $0x90] sm:$0xff] 0.0
        %282 = vst [vmem:[#allocation2 + $0x98] sm:$0xff] 0.0
        %283 = vst [vmem:[#allocation2 + $0xa0] sm:$0xff] 0.0
        %284 = vst [vmem:[#allocation2 + $0xa8] sm:$0xff] 0.0
        %285 = vst [vmem:[#allocation2 + $0xb0] sm:$0xff] 0.0
        %286 = vst [vmem:[#allocation2 + $0xb8] sm:$0xff] 0.0
        %287 = vst [vmem:[#allocation2 + $0xc0] sm:$0xff] 0.0
        %288 = vst [vmem:[#allocation2 + $0xc8] sm:$0xff] 0.0
        %289 = vst [vmem:[#allocation2 + $0xd0] sm:$0xff] 0.0
        %290 = vst [vmem:[#allocation2 + $0xd8] sm:$0xff] 0.0
        %291 = vst [vmem:[#allocation2 + $0xe0] sm:$0xff] 0.0
        %292 = vst [vmem:[#allocation2 + $0xe8] sm:$0xff] 0.0
        %293 = vst [vmem:[#allocation2 + $0xf0] sm:$0xff] 0.0
        %294 = vst [vmem:[#allocation2 + $0xf8] sm:$0xff] 0.0
      $region36: #{self_attention.5} parent=31 // pred_fallthru
        _
      %v295 = vld [vmem:[#allocation2] sm:$0xff]
      %v296 = vld [vmem:[#allocation2 + $0x8] sm:$0xff]
      %v297 = vld [vmem:[#allocation2 + $0x10] sm:$0xff]
      %v298 = vld [vmem:[#allocation2 + $0x18] sm:$0xff]
      %v299 = vld [vmem:[#allocation2 + $0x20] sm:$0xff]
      %v300 = vld [vmem:[#allocation2 + $0x28] sm:$0xff]
      %v301 = vld [vmem:[#allocation2 + $0x30] sm:$0xff]
      %v302 = vld [vmem:[#allocation2 + $0x38] sm:$0xff]
      %v303 = vld [vmem:[#allocation2 + $0x40] sm:$0xff]
      %v304 = vld [vmem:[#allocation2 + $0x48] sm:$0xff]
      %v305 = vld [vmem:[#allocation2 + $0x50] sm:$0xff]
      %v306 = vld [vmem:[#allocation2 + $0x58] sm:$0xff]
      %v307 = vld [vmem:[#allocation2 + $0x60] sm:$0xff]
      %v308 = vld [vmem:[#allocation2 + $0x68] sm:$0xff]
      %v309 = vld [vmem:[#allocation2 + $0x70] sm:$0xff]
      %v310 = vld [vmem:[#allocation2 + $0x78] sm:$0xff]
      %v311 = vld [vmem:[#allocation2 + $0x80] sm:$0xff]
      %v312 = vld [vmem:[#allocation2 + $0x88] sm:$0xff]
      %v313 = vld [vmem:[#allocation2 + $0x90] sm:$0xff]
      %v314 = vld [vmem:[#allocation2 + $0x98] sm:$0xff]
      %v315 = vld [vmem:[#allocation2 + $0xa0] sm:$0xff]
      %v316 = vld [vmem:[#allocation2 + $0xa8] sm:$0xff]
      %v317 = vld [vmem:[#allocation2 + $0xb0] sm:$0xff]
      %v318 = vld [vmem:[#allocation2 + $0xb8] sm:$0xff]
      %v319 = vld [vmem:[#allocation2 + $0xc0] sm:$0xff]
      %v320 = vld [vmem:[#allocation2 + $0xc8] sm:$0xff]
      %v321 = vld [vmem:[#allocation2 + $0xd0] sm:$0xff]
      %v322 = vld [vmem:[#allocation2 + $0xd8] sm:$0xff]
      %v323 = vld [vmem:[#allocation2 + $0xe0] sm:$0xff]
      %v324 = vld [vmem:[#allocation2 + $0xe8] sm:$0xff]
      %v325 = vld [vmem:[#allocation2 + $0xf0] sm:$0xff]
      %v326 = vld [vmem:[#allocation2 + $0xf8] sm:$0xff]
      %v327 = vld [vmem:[%s236] sm:$0xf]
      %v328 = vld [vmem:[%s236 + $0x4] sm:$0xf]
      %v329 = vld [vmem:[%s236 + $0x8] sm:$0xf]
      %v330 = vld [vmem:[%s236 + $0xc] sm:$0xf]
      %v331 = vld [vmem:[%s236 + $0x10] sm:$0xf]
      %v332 = vld [vmem:[%s236 + $0x14] sm:$0xf]
      %v333 = vld [vmem:[%s236 + $0x18] sm:$0xf]
      %v334 = vld [vmem:[%s236 + $0x1c] sm:$0xf]
      %v335 = vld [vmem:[%s236 + $0x20] sm:$0xf]
      %v336 = vld [vmem:[%s236 + $0x24] sm:$0xf]
      %v337 = vld [vmem:[%s236 + $0x28] sm:$0xf]
      %v338 = vld [vmem:[%s236 + $0x2c] sm:$0xf]
      %v339 = vld [vmem:[%s236 + $0x30] sm:$0xf]
      %v340 = vld [vmem:[%s236 + $0x34] sm:$0xf]
      %v341 = vld [vmem:[%s236 + $0x38] sm:$0xf]
      %v342 = vld [vmem:[%s236 + $0x3c] sm:$0xf]
      %v343 = vld [vmem:[%s236 + $0x40] sm:$0xf]
      %v344 = vld [vmem:[%s236 + $0x44] sm:$0xf]
      %v345 = vld [vmem:[%s236 + $0x48] sm:$0xf]
      %v346 = vld [vmem:[%s236 + $0x4c] sm:$0xf]
      %v347 = vld [vmem:[%s236 + $0x50] sm:$0xf]
      %v348 = vld [vmem:[%s236 + $0x54] sm:$0xf]
      %v349 = vld [vmem:[%s236 + $0x58] sm:$0xf]
      %v350 = vld [vmem:[%s236 + $0x5c] sm:$0xf]
      %v351 = vld [vmem:[%s236 + $0x60] sm:$0xf]
      %v352 = vld [vmem:[%s236 + $0x64] sm:$0xf]
      %v353 = vld [vmem:[%s236 + $0x68] sm:$0xf]
      %v354 = vld [vmem:[%s236 + $0x6c] sm:$0xf]
      %v355 = vld [vmem:[%s236 + $0x70] sm:$0xf]
      %v356 = vld [vmem:[%s236 + $0x74] sm:$0xf]
      %v357 = vld [vmem:[%s236 + $0x78] sm:$0xf]
      %v358 = vld [vmem:[%s236 + $0x7c] sm:$0xf]
      %v359 = vld [vmem:[%s245] sm:$0xf]
      %v360 = vld [vmem:[%s245 + $0x4] sm:$0xf]
      %v361 = vld [vmem:[%s245 + $0x8] sm:$0xf]
      %v362 = vld [vmem:[%s245 + $0xc] sm:$0xf]
      %v363 = vld [vmem:[%s245 + $0x10] sm:$0xf]
      %v364 = vld [vmem:[%s245 + $0x14] sm:$0xf]
      %v365 = vld [vmem:[%s245 + $0x18] sm:$0xf]
      %v366 = vld [vmem:[%s245 + $0x1c] sm:$0xf]
      %v367 = vld [vmem:[%s245 + $0x20] sm:$0xf]
      %v368 = vld [vmem:[%s245 + $0x24] sm:$0xf]
      %v369 = vld [vmem:[%s245 + $0x28] sm:$0xf]
      %v370 = vld [vmem:[%s245 + $0x2c] sm:$0xf]
      %v371 = vld [vmem:[%s245 + $0x30] sm:$0xf]
      %v372 = vld [vmem:[%s245 + $0x34] sm:$0xf]
      %v373 = vld [vmem:[%s245 + $0x38] sm:$0xf]
      %v374 = vld [vmem:[%s245 + $0x3c] sm:$0xf]
      %v407 = vunpack.c.l.b16 %v327
      %v408 = vunpack.c.l.b16 %v328
      %v409 = vunpack.c.l.b16 %v329
      %v410 = vunpack.c.l.b16 %v330
      %v411 = vunpack.c.l.b16 %v331
      %v412 = vunpack.c.l.b16 %v332
      %v413 = vunpack.c.l.b16 %v333
      %v414 = vunpack.c.l.b16 %v334
      %v415 = vunpack.c.l.b16 %v335
      %v416 = vunpack.c.l.b16 %v336
      %v417 = vunpack.c.l.b16 %v337
      %v418 = vunpack.c.l.b16 %v338
      %v419 = vunpack.c.l.b16 %v339
      %v420 = vunpack.c.l.b16 %v340
      %v421 = vunpack.c.l.b16 %v341
      %v422 = vunpack.c.l.b16 %v342
      %v423 = vunpack.c.l.b16 %v343
      %v424 = vunpack.c.l.b16 %v344
      %v425 = vunpack.c.l.b16 %v345
      %v426 = vunpack.c.l.b16 %v346
      %v427 = vunpack.c.l.b16 %v347
      %v428 = vunpack.c.l.b16 %v348
      %v429 = vunpack.c.l.b16 %v349
      %v430 = vunpack.c.l.b16 %v350
      %v431 = vunpack.c.l.b16 %v351
      %v432 = vunpack.c.l.b16 %v352
      %v433 = vunpack.c.l.b16 %v353
      %v434 = vunpack.c.l.b16 %v354
      %v435 = vunpack.c.l.b16 %v355
      %v436 = vunpack.c.l.b16 %v356
      %v437 = vunpack.c.l.b16 %v357
      %v438 = vunpack.c.l.b16 %v358
      %v439 = vpack.c.b16 %v408, %v407
      %v440 = vpack.c.b16 %v410, %v409
      %v441 = vpack.c.b16 %v412, %v411
      %v442 = vpack.c.b16 %v414, %v413
      %v443 = vpack.c.b16 %v416, %v415
      %v444 = vpack.c.b16 %v418, %v417
      %v445 = vpack.c.b16 %v420, %v419
      %v446 = vpack.c.b16 %v422, %v421
      %v447 = vpack.c.b16 %v424, %v423
      %v448 = vpack.c.b16 %v426, %v425
      %v449 = vpack.c.b16 %v428, %v427
      %v450 = vpack.c.b16 %v430, %v429
      %v451 = vpack.c.b16 %v432, %v431
      %v452 = vpack.c.b16 %v434, %v433
      %v453 = vpack.c.b16 %v436, %v435
      %v454 = vpack.c.b16 %v438, %v437
      %v487 = vunpack.c.l.b16 %v359
      %v488 = vunpack.c.l.b16 %v360
      %v489 = vunpack.c.l.b16 %v361
      %v490 = vunpack.c.l.b16 %v362
      %v491 = vunpack.c.l.b16 %v363
      %v492 = vunpack.c.l.b16 %v364
      %v493 = vunpack.c.l.b16 %v365
      %v494 = vunpack.c.l.b16 %v366
      %v495 = vunpack.c.l.b16 %v367
      %v496 = vunpack.c.l.b16 %v368
      %v497 = vunpack.c.l.b16 %v369
      %v498 = vunpack.c.l.b16 %v370
      %v499 = vunpack.c.l.b16 %v371
      %v500 = vunpack.c.l.b16 %v372
      %v501 = vunpack.c.l.b16 %v373
      %v502 = vunpack.c.l.b16 %v374
      %v503 = vpack.c.b16 %v488, %v487
      %v504 = vpack.c.b16 %v490, %v489
      %v505 = vpack.c.b16 %v492, %v491
      %v506 = vpack.c.b16 %v494, %v493
      %v507 = vpack.c.b16 %v496, %v495
      %v508 = vpack.c.b16 %v498, %v497
      %v509 = vpack.c.b16 %v500, %v499
      %v510 = vpack.c.b16 %v502, %v501
      %519 = vmatpush.bf16.msra.mxu0 %v510
      %520 = vmatpush.bf16.msra.mxu0 %v509
      %521 = vmatpush.bf16.msra.mxu0 %v508
      %522 = vmatpush.bf16.msra.mxu0 %v507
      %523 = vmatpush.bf16.msra.mxu0 %v506
      %524 = vmatpush.bf16.msra.mxu0 %v505
      %525 = vmatpush.bf16.msra.mxu0 %v504
      %526 = vmatpush.bf16.msra.mxu0 %v503
      %527 = vmatmul.bf16.gmra.mxu0 %v439
      %v528 = vpop.f32.mrf.mxu0
      %v529 = vadd.f32 0.0, %v528
      %v530 = vpop.f32.mrf.mxu0
      %v531 = vadd.f32 0.0, %v530
      %532 = vmatmul.bf16.gmra.mxu0 %v440
      %v533 = vpop.f32.mrf.mxu0
      %v534 = vadd.f32 0.0, %v533
      %v535 = vpop.f32.mrf.mxu0
      %v536 = vadd.f32 0.0, %v535
      %537 = vmatmul.bf16.gmra.mxu0 %v441
      %v538 = vpop.f32.mrf.mxu0
      %v539 = vadd.f32 0.0, %v538
      %v540 = vpop.f32.mrf.mxu0
      %v541 = vadd.f32 0.0, %v540
      %542 = vmatmul.bf16.gmra.mxu0 %v442
      %v543 = vpop.f32.mrf.mxu0
      %v544 = vadd.f32 0.0, %v543
      %v545 = vpop.f32.mrf.mxu0
      %v546 = vadd.f32 0.0, %v545
      %547 = vmatmul.bf16.gmra.mxu0 %v443
      %v548 = vpop.f32.mrf.mxu0
      %v549 = vadd.f32 0.0, %v548
      %v550 = vpop.f32.mrf.mxu0
      %v551 = vadd.f32 0.0, %v550
      %552 = vmatmul.bf16.gmra.mxu0 %v444
      %v553 = vpop.f32.mrf.mxu0
      %v554 = vadd.f32 0.0, %v553
      %v555 = vpop.f32.mrf.mxu0
      %v556 = vadd.f32 0.0, %v555
      %557 = vmatmul.bf16.gmra.mxu0 %v445
      %v558 = vpop.f32.mrf.mxu0
      %v559 = vadd.f32 0.0, %v558
      %v560 = vpop.f32.mrf.mxu0
      %v561 = vadd.f32 0.0, %v560
      %562 = vmatmul.bf16.gmra.mxu0 %v446
      %v563 = vpop.f32.mrf.mxu0
      %v564 = vadd.f32 0.0, %v563
      %v565 = vpop.f32.mrf.mxu0
      %v566 = vadd.f32 0.0, %v565
      %567 = vmatmul.bf16.gmra.mxu0 %v447
      %v568 = vpop.f32.mrf.mxu0
      %v569 = vadd.f32 0.0, %v568
      %v570 = vpop.f32.mrf.mxu0
      %v571 = vadd.f32 0.0, %v570
      %572 = vmatmul.bf16.gmra.mxu0 %v448
      %v573 = vpop.f32.mrf.mxu0
      %v574 = vadd.f32 0.0, %v573
      %v575 = vpop.f32.mrf.mxu0
      %v576 = vadd.f32 0.0, %v575
      %577 = vmatmul.bf16.gmra.mxu0 %v449
      %v578 = vpop.f32.mrf.mxu0
      %v579 = vadd.f32 0.0, %v578
      %v580 = vpop.f32.mrf.mxu0
      %v581 = vadd.f32 0.0, %v580
      %582 = vmatmul.bf16.gmra.mxu0 %v450
      %v583 = vpop.f32.mrf.mxu0
      %v584 = vadd.f32 0.0, %v583
      %v585 = vpop.f32.mrf.mxu0
      %v586 = vadd.f32 0.0, %v585
      %587 = vmatmul.bf16.gmra.mxu0 %v451
      %v588 = vpop.f32.mrf.mxu0
      %v589 = vadd.f32 0.0, %v588
      %v590 = vpop.f32.mrf.mxu0
      %v591 = vadd.f32 0.0, %v590
      %592 = vmatmul.bf16.gmra.mxu0 %v452
      %v593 = vpop.f32.mrf.mxu0
      %v594 = vadd.f32 0.0, %v593
      %v595 = vpop.f32.mrf.mxu0
      %v596 = vadd.f32 0.0, %v595
      %597 = vmatmul.bf16.gmra.mxu0 %v453
      %v598 = vpop.f32.mrf.mxu0
      %v599 = vadd.f32 0.0, %v598
      %v600 = vpop.f32.mrf.mxu0
      %v601 = vadd.f32 0.0, %v600
      %602 = vmatmul.bf16.gmra.mxu0 %v454
      %v603 = vpop.f32.mrf.mxu0
      %v604 = vadd.f32 0.0, %v603
      %v605 = vpop.f32.mrf.mxu0
      %v606 = vadd.f32 0.0, %v605
      %607 = vdwg.mxu0
      %v608 = vadd.f32 %v295, %v529
      %v609 = vadd.f32 %v296, %v531
      %v610 = vadd.f32 %v297, %v534
      %v611 = vadd.f32 %v298, %v536
      %v612 = vadd.f32 %v299, %v539
      %v613 = vadd.f32 %v300, %v541
      %v614 = vadd.f32 %v301, %v544
      %v615 = vadd.f32 %v302, %v546
      %v616 = vadd.f32 %v303, %v549
      %v617 = vadd.f32 %v304, %v551
      %v618 = vadd.f32 %v305, %v554
      %v619 = vadd.f32 %v306, %v556
      %v620 = vadd.f32 %v307, %v559
      %v621 = vadd.f32 %v308, %v561
      %v622 = vadd.f32 %v309, %v564
      %v623 = vadd.f32 %v310, %v566
      %v624 = vadd.f32 %v311, %v569
      %v625 = vadd.f32 %v312, %v571
      %v626 = vadd.f32 %v313, %v574
      %v627 = vadd.f32 %v314, %v576
      %v628 = vadd.f32 %v315, %v579
      %v629 = vadd.f32 %v316, %v581
      %v630 = vadd.f32 %v317, %v584
      %v631 = vadd.f32 %v318, %v586
      %v632 = vadd.f32 %v319, %v589
      %v633 = vadd.f32 %v320, %v591
      %v634 = vadd.f32 %v321, %v594
      %v635 = vadd.f32 %v322, %v596
      %v636 = vadd.f32 %v323, %v599
      %v637 = vadd.f32 %v324, %v601
      %v638 = vadd.f32 %v325, %v604
      %v639 = vadd.f32 %v326, %v606
      %640 = vst [vmem:[#allocation2] sm:$0xff] %v608
      %641 = vst [vmem:[#allocation2 + $0x8] sm:$0xff] %v609
      %642 = vst [vmem:[#allocation2 + $0x10] sm:$0xff] %v610
      %643 = vst [vmem:[#allocation2 + $0x18] sm:$0xff] %v611
      %644 = vst [vmem:[#allocation2 + $0x20] sm:$0xff] %v612
      %645 = vst [vmem:[#allocation2 + $0x28] sm:$0xff] %v613
      %646 = vst [vmem:[#allocation2 + $0x30] sm:$0xff] %v614
      %647 = vst [vmem:[#allocation2 + $0x38] sm:$0xff] %v615
      %648 = vst [vmem:[#allocation2 + $0x40] sm:$0xff] %v616
      %649 = vst [vmem:[#allocation2 + $0x48] sm:$0xff] %v617
      %650 = vst [vmem:[#allocation2 + $0x50] sm:$0xff] %v618
      %651 = vst [vmem:[#allocation2 + $0x58] sm:$0xff] %v619
      %652 = vst [vmem:[#allocation2 + $0x60] sm:$0xff] %v620
      %653 = vst [vmem:[#allocation2 + $0x68] sm:$0xff] %v621
      %654 = vst [vmem:[#allocation2 + $0x70] sm:$0xff] %v622
      %655 = vst [vmem:[#allocation2 + $0x78] sm:$0xff] %v623
      %656 = vst [vmem:[#allocation2 + $0x80] sm:$0xff] %v624
      %657 = vst [vmem:[#allocation2 + $0x88] sm:$0xff] %v625
      %658 = vst [vmem:[#allocation2 + $0x90] sm:$0xff] %v626
      %659 = vst [vmem:[#allocation2 + $0x98] sm:$0xff] %v627
      %660 = vst [vmem:[#allocation2 + $0xa0] sm:$0xff] %v628
      %661 = vst [vmem:[#allocation2 + $0xa8] sm:$0xff] %v629
      %662 = vst [vmem:[#allocation2 + $0xb0] sm:$0xff] %v630
      %663 = vst [vmem:[#allocation2 + $0xb8] sm:$0xff] %v631
      %664 = vst [vmem:[#allocation2 + $0xc0] sm:$0xff] %v632
      %665 = vst [vmem:[#allocation2 + $0xc8] sm:$0xff] %v633
      %666 = vst [vmem:[#allocation2 + $0xd0] sm:$0xff] %v634
      %667 = vst [vmem:[#allocation2 + $0xd8] sm:$0xff] %v635
      %668 = vst [vmem:[#allocation2 + $0xe0] sm:$0xff] %v636
      %669 = vst [vmem:[#allocation2 + $0xe8] sm:$0xff] %v637
      %670 = vst [vmem:[#allocation2 + $0xf0] sm:$0xff] %v638
      %671 = vst [vmem:[#allocation2 + $0xf8] sm:$0xff] %v639
      // Predicated region
      $region37: #{self_attention.5} parent=31 // pred_check
        %p672 = pneg %p259
      $region38: #{self_attention.5} parent=31 // pred_check_branch
        %674 = sbr.rel (%p672) target = $region40
      $region39: #{self_attention.5} parent=31 // pred_region
        %v675 = vld [vmem:[#allocation2] sm:$0xff]
        %v676 = vld [vmem:[#allocation2 + $0x8] sm:$0xff]
        %v677 = vld [vmem:[#allocation2 + $0x10] sm:$0xff]
        %v678 = vld [vmem:[#allocation2 + $0x18] sm:$0xff]
        %v679 = vld [vmem:[#allocation2 + $0x20] sm:$0xff]
        %v680 = vld [vmem:[#allocation2 + $0x28] sm:$0xff]
        %v681 = vld [vmem:[#allocation2 + $0x30] sm:$0xff]
        %v682 = vld [vmem:[#allocation2 + $0x38] sm:$0xff]
        %v683 = vld [vmem:[#allocation2 + $0x40] sm:$0xff]
        %v684 = vld [vmem:[#allocation2 + $0x48] sm:$0xff]
        %v685 = vld [vmem:[#allocation2 + $0x50] sm:$0xff]
        %v686 = vld [vmem:[#allocation2 + $0x58] sm:$0xff]
        %v687 = vld [vmem:[#allocation2 + $0x60] sm:$0xff]
        %v688 = vld [vmem:[#allocation2 + $0x68] sm:$0xff]
        %v689 = vld [vmem:[#allocation2 + $0x70] sm:$0xff]
        %v690 = vld [vmem:[#allocation2 + $0x78] sm:$0xff]
        %v691 = vld [vmem:[#allocation2 + $0x80] sm:$0xff]
        %v692 = vld [vmem:[#allocation2 + $0x88] sm:$0xff]
        %v693 = vld [vmem:[#allocation2 + $0x90] sm:$0xff]
        %v694 = vld [vmem:[#allocation2 + $0x98] sm:$0xff]
        %v695 = vld [vmem:[#allocation2 + $0xa0] sm:$0xff]
        %v696 = vld [vmem:[#allocation2 + $0xa8] sm:$0xff]
        %v697 = vld [vmem:[#allocation2 + $0xb0] sm:$0xff]
        %v698 = vld [vmem:[#allocation2 + $0xb8] sm:$0xff]
        %v699 = vld [vmem:[#allocation2 + $0xc0] sm:$0xff]
        %v700 = vld [vmem:[#allocation2 + $0xc8] sm:$0xff]
        %v701 = vld [vmem:[#allocation2 + $0xd0] sm:$0xff]
        %v702 = vld [vmem:[#allocation2 + $0xd8] sm:$0xff]
        %v703 = vld [vmem:[#allocation2 + $0xe0] sm:$0xff]
        %v704 = vld [vmem:[#allocation2 + $0xe8] sm:$0xff]
        %v705 = vld [vmem:[#allocation2 + $0xf0] sm:$0xff]
        %v706 = vld [vmem:[#allocation2 + $0xf8] sm:$0xff]
        %v707 = vld [vmem:[%s249] sm:$0x1]
        %v709 = vperm.slane %v707, 0
        %v711 = vadd.f32 %v675, %v709
        %v712 = vadd.f32 %v676, %v709
        %v713 = vadd.f32 %v677, %v709
        %v714 = vadd.f32 %v678, %v709
        %v715 = vadd.f32 %v679, %v709
        %v716 = vadd.f32 %v680, %v709
        %v717 = vadd.f32 %v681, %v709
        %v718 = vadd.f32 %v682, %v709
        %v719 = vadd.f32 %v683, %v709
        %v720 = vadd.f32 %v684, %v709
        %v721 = vadd.f32 %v685, %v709
        %v722 = vadd.f32 %v686, %v709
        %v723 = vadd.f32 %v687, %v709
        %v724 = vadd.f32 %v688, %v709
        %v725 = vadd.f32 %v689, %v709
        %v726 = vadd.f32 %v690, %v709
        %v727 = vadd.f32 %v691, %v709
        %v728 = vadd.f32 %v692, %v709
        %v729 = vadd.f32 %v693, %v709
        %v730 = vadd.f32 %v694, %v709
        %v731 = vadd.f32 %v695, %v709
        %v732 = vadd.f32 %v696, %v709
        %v733 = vadd.f32 %v697, %v709
        %v734 = vadd.f32 %v698, %v709
        %v735 = vadd.f32 %v699, %v709
        %v736 = vadd.f32 %v700, %v709
        %v737 = vadd.f32 %v701, %v709
        %v738 = vadd.f32 %v702, %v709
        %v739 = vadd.f32 %v703, %v709
        %v740 = vadd.f32 %v704, %v709
        %v741 = vadd.f32 %v705, %v709
        %v742 = vadd.f32 %v706, %v709
        %v743 = vpack.c.bf16 %v711, %v711
        %v744 = vpack.c.bf16 %v712, %v712
        %v745 = vpack.c.bf16 %v713, %v713
        %v746 = vpack.c.bf16 %v714, %v714
        %v747 = vpack.c.bf16 %v715, %v715
        %v748 = vpack.c.bf16 %v716, %v716
        %v749 = vpack.c.bf16 %v717, %v717
        %v750 = vpack.c.bf16 %v718, %v718
        %v751 = vpack.c.bf16 %v719, %v719
        %v752 = vpack.c.bf16 %v720, %v720
        %v753 = vpack.c.bf16 %v721, %v721
        %v754 = vpack.c.bf16 %v722, %v722
        %v755 = vpack.c.bf16 %v723, %v723
        %v756 = vpack.c.bf16 %v724, %v724
        %v757 = vpack.c.bf16 %v725, %v725
        %v758 = vpack.c.bf16 %v726, %v726
        %v759 = vpack.c.bf16 %v727, %v727
        %v760 = vpack.c.bf16 %v728, %v728
        %v761 = vpack.c.bf16 %v729, %v729
        %v762 = vpack.c.bf16 %v730, %v730
        %v763 = vpack.c.bf16 %v731, %v731
        %v764 = vpack.c.bf16 %v732, %v732
        %v765 = vpack.c.bf16 %v733, %v733
        %v766 = vpack.c.bf16 %v734, %v734
        %v767 = vpack.c.bf16 %v735, %v735
        %v768 = vpack.c.bf16 %v736, %v736
        %v769 = vpack.c.bf16 %v737, %v737
        %v770 = vpack.c.bf16 %v738, %v738
        %v771 = vpack.c.bf16 %v739, %v739
        %v772 = vpack.c.bf16 %v740, %v740
        %v773 = vpack.c.bf16 %v741, %v741
        %v774 = vpack.c.bf16 %v742, %v742
        %775 = vst [vmem:[%s257] sm:$0xf] %v743
        %776 = vst [vmem:[%s257 + $0x4] sm:$0xf] %v744
        %777 = vst [vmem:[%s257 + $0x8] sm:$0xf] %v745
        %778 = vst [vmem:[%s257 + $0xc] sm:$0xf] %v746
        %779 = vst [vmem:[%s257 + $0x10] sm:$0xf] %v747
        %780 = vst [vmem:[%s257 + $0x14] sm:$0xf] %v748
        %781 = vst [vmem:[%s257 + $0x18] sm:$0xf] %v749
        %782 = vst [vmem:[%s257 + $0x1c] sm:$0xf] %v750
        %783 = vst [vmem:[%s257 + $0x20] sm:$0xf] %v751
        %784 = vst [vmem:[%s257 + $0x24] sm:$0xf] %v752
        %785 = vst [vmem:[%s257 + $0x28] sm:$0xf] %v753
        %786 = vst [vmem:[%s257 + $0x2c] sm:$0xf] %v754
        %787 = vst [vmem:[%s257 + $0x30] sm:$0xf] %v755
        %788 = vst [vmem:[%s257 + $0x34] sm:$0xf] %v756
        %789 = vst [vmem:[%s257 + $0x38] sm:$0xf] %v757
        %790 = vst [vmem:[%s257 + $0x3c] sm:$0xf] %v758
        %791 = vst [vmem:[%s257 + $0x40] sm:$0xf] %v759
        %792 = vst [vmem:[%s257 + $0x44] sm:$0xf] %v760
        %793 = vst [vmem:[%s257 + $0x48] sm:$0xf] %v761
        %794 = vst [vmem:[%s257 + $0x4c] sm:$0xf] %v762
        %795 = vst [vmem:[%s257 + $0x50] sm:$0xf] %v763
        %796 = vst [vmem:[%s257 + $0x54] sm:$0xf] %v764
        %797 = vst [vmem:[%s257 + $0x58] sm:$0xf] %v765
        %798 = vst [vmem:[%s257 + $0x5c] sm:$0xf] %v766
        %799 = vst [vmem:[%s257 + $0x60] sm:$0xf] %v767
        %800 = vst [vmem:[%s257 + $0x64] sm:$0xf] %v768
        %801 = vst [vmem:[%s257 + $0x68] sm:$0xf] %v769
        %802 = vst [vmem:[%s257 + $0x6c] sm:$0xf] %v770
        %803 = vst [vmem:[%s257 + $0x70] sm:$0xf] %v771
        %804 = vst [vmem:[%s257 + $0x74] sm:$0xf] %v772
        %805 = vst [vmem:[%s257 + $0x78] sm:$0xf] %v773
        %806 = vst [vmem:[%s257 + $0x7c] sm:$0xf] %v774
      $region40: #{self_attention.5} parent=31 // pred_fallthru
        _
      %s807 = smul.u32 32, %s19
      %p808 = scmp.lt.s32.totalorder %s807, 63
      %s809 = scalar_select %p808, %s807, 63
      %p810 = scmp.lt.s32.totalorder %s20, 0
      %s811 = scalar_select %p810, %s20, 0
      %s812 = sadd.s32 %s811, %s809
      %s813 = smul.addr %s812, 4
      %s814 = scalar_lea.vmem %s3, %s813
      // Predicated region
      $region41: #{self_attention.5} parent=31 // pred_check
        %p815 = pneg %p135
      $region42: #{self_attention.5} parent=31 // pred_check_branch
        %817 = sbr.rel (%p815) target = $region44
      $region43: #{self_attention.5} parent=31 // pred_region
        %s818 = smul.u32 32, %s19
      $region44: #{self_attention.5} parent=31 // pred_fallthru
        _
    $region32: #{self_attention.5} parent=5 // pred_fallthru
      _
    %p819 = scmp.le.s32.totalorder 2, %s9
    // Predicated region
    $region45: #{self_attention.5} parent=5 // pred_check
      %p820 = pneg %p819
    $region46: #{self_attention.5} parent=5 // pred_check_branch
      %822 = sbr.rel (%p820) target = $region48
    $region47: #{self_attention.5} parent=5 // pred_region
      %s823 = ssub.s32 %s9, 2
      // Predicated region
      $region49: #{self_attention.5} parent=47 // pred_check
        %p824 = pneg %p141
      $region50: #{self_attention.5} parent=47 // pred_check_branch
        %826 = sbr.rel (%p824) target = $region52
      $region51: #{self_attention.5} parent=47 // pred_region
        %s827 = smul.u32 32, %s22
        %p828 = scmp.lt.s32.totalorder %s827, 63
        %s829 = scalar_select %p828, %s827, 63
        %p830 = scmp.lt.s32.totalorder %s23, 0
        %s831 = scalar_select %p830, %s23, 0
        %s832 = sadd.s32 %s831, %s829
        %s833 = smul.addr %s832, 4
        %s834 = scalar_lea.vmem %s3, %s833
      $region52: #{self_attention.5} parent=47 // pred_fallthru
        _
    $region48: #{self_attention.5} parent=5 // pred_fallthru
      _
  $region6: #{self_attention.5} parent=0 // loop_footer
    %s13 = sadd.s32 1, %s9
  $region7: #{self_attention.5} parent=0 // loop_footer_branch
    %8 = sbr.rel target = $region3
  $region8: #{self_attention.5} parent=0 // loop_exit
    _

// kernel: self_attention.7
$region0: #{self_attention.7}
  #allocation0 [shape = 'u32[]', space=smem, size = 0x4, offset = 0x4, fixed_abs, tag = 'smem constant byte address 0x4 - core index']
  #allocation1 [shape = 'u32[72,128]{1,0:T(1,128)}', space=vmem, size = 0x9000, scoped, tag = 'internal scratch']
  #allocation2 [shape = 'f32[1,1]{1,0:T(1,128)S(1)}', space=vmem, size = 0x200, scoped, tag = 'scoped memory for self_attention.7']
  %s0 = inlined_call_operand.vmem [shape: bf16[2,256,16], index: 0, kind: input, shape index: {}]
  %s1 = inlined_call_operand.vmem [shape: bf16[2,256,16], index: 1, kind: input, shape index: {}]
  %s2 = inlined_call_operand.vmem [shape: bf16[2,256,128], index: 2, kind: input, shape index: {}]
  %s3 = inlined_call_operand.vmem [shape: f32[2,256,128], index: 3, kind: input, shape index: {}]
  %s4 = inlined_call_operand.<no memory space> [shape: f32[1,1], index: 4, kind: input, shape index: {}]
  %s5 = inlined_call_operand.hbm [shape: f32[2,256,128], index: 5, kind: output, shape index: {}]
  %s6 = sld [smem:[#allocation0]]
  $region53: #{self_attention.7} parent=0
    _
  %s8 = ssub.s32 1, %s6
  %s9 = scalar_select 0, %s8, %s6
  %v10 = vstv %s4
  %11 = vst [vmem:[#allocation2] sm:$0x1] %v10
  $region1: #{self_attention.7} parent=0
    #allocation3 [shape = 'u8[262144]{0}', space=vmem, size = 0x40000, scoped, tag = 'output window, operand 0']
    #allocation4 [shape = 's32[2]{0}', space=sflag, size = 0x8, scoped, tag = 'scoped memory for self_attention.7']
    %12 = vsyncpa [#allocation4], 0
    %s13 = scalar_lea.sflag [#allocation4], 1
    %14 = vsyncpa %s13, 0
    loop: start=0, step=1, limit=4
    $region2: #{self_attention.7} parent=1 // loop_pre_header
      _
    $region3: #{self_attention.7} parent=1 // loop_header
      %s16 = sphi 0, %s20
      %p17 = scmp.ge.s32.totalorder %s16, 4
      %s23 = sphi 0, %s35
      %s24 = sphi 0, %s31
      %s25 = sphi 0, %s23
      %s26 = sphi 0, %s24
      %s27 = sphi 0, %s25
      %s28 = sphi 0, %s26
      %s40 = sphi 0, %s42
      %s43 = sphi 0, %s40
      %s44 = sphi 0, %s43
      %s60 = sphi 0, %s44
      %s66 = sphi 0, %s68
      %s69 = sphi 0, %s66
      %s70 = sphi 0, %s69
      %s86 = sphi 0, %s70
      %s92 = sphi 0, %s94
      %s95 = sphi 0, %s92
      %s96 = sphi 0, %s95
      %s112 = sphi 0, %s96
      %s120 = sphi 0, %s122
      %s123 = sphi 0, %s120
      %s124 = sphi 0, %s123
      %s140 = sphi 0, %s124
      %s144 = sphi 0, %s144
      %s146 = sphi 0, %s144
      %s147 = sphi 0, %s146
      %s161 = sphi 0, %s147
      %s169 = sphi 0, %s171
      %s172 = sphi 0, %s169
      %s173 = sphi 0, %s172
      %s189 = sphi 0, %s173
    $region4: #{self_attention.7} parent=1 // loop_header_branch
      %19 = sbr.rel (%p17) target = $region8
    $region5: #{self_attention.7} parent=1 // loop_body
      %s21 = ssub.s32 %s16, 1
      %s22 = ssub.s32 %s16, 2
      %s29 = sadd.s32 1, %s24
      %p30 = scmp.ge.s32.totalorder %s29, 1
      %s31 = scalar_select %p30, 0, %s29
      %s32 = sadd.s32 1, %s23
      %s33 = scalar_select %p30, %s32, %s23
      %p34 = scmp.ge.s32.totalorder %s33, 2
      %s35 = scalar_select %p34, 0, %s33
      %s36 = ssub.s32 %s23, %s35
      %s37 = ssub.s32 %s24, %s31
      %s38 = sor.u32 %s36, %s37
      %p39 = scmp.eq.s32.totalorder %s38, 0
      %s41 = sadd.s32 %s40, 1
      %s42 = scalar_select %p39, %s40, %s41
      %p45 = pneg %p39
      %p46 = scmp.eq.s32.totalorder %s16, 1
      %p47 = por %p45, %p46
      %p48 = scmp.ne.s32.totalorder %s40, %s43
      %p49 = scmp.eq.s32.totalorder %s16, 0
      %p50 = por %p48, %p49
      %p51 = scmp.ne.s32.totalorder %s40, %s43
      %p52 = scmp.eq.s32.totalorder %s21, 1
      %p53 = por %p51, %p52
      %p54 = scmp.ne.s32.totalorder %s43, %s44
      %p55 = scmp.eq.s32.totalorder %s21, 0
      %p56 = por %p54, %p55
      %p57 = scmp.ne.s32.totalorder %s43, %s44
      %p58 = scmp.eq.s32.totalorder %s22, 1
      %p59 = por %p57, %p58
      %p61 = scmp.ne.s32.totalorder %s44, %s60
      %p62 = scmp.eq.s32.totalorder %s22, 0
      %p63 = por %p61, %p62
      %s64 = ssub.s32 %s23, %s35
      %p65 = scmp.eq.s32.totalorder %s64, 0
      %s67 = sadd.s32 %s66, 1
      %s68 = scalar_select %p65, %s66, %s67
      %p71 = pneg %p65
      %p72 = scmp.eq.s32.totalorder %s16, 1
      %p73 = por %p71, %p72
      %p74 = scmp.ne.s32.totalorder %s66, %s69
      %p75 = scmp.eq.s32.totalorder %s16, 0
      %p76 = por %p74, %p75
      %p77 = scmp.ne.s32.totalorder %s66, %s69
      %p78 = scmp.eq.s32.totalorder %s21, 1
      %p79 = por %p77, %p78
      %p80 = scmp.ne.s32.totalorder %s69, %s70
      %p81 = scmp.eq.s32.totalorder %s21, 0
      %p82 = por %p80, %p81
      %p83 = scmp.ne.s32.totalorder %s69, %s70
      %p84 = scmp.eq.s32.totalorder %s22, 1
      %p85 = por %p83, %p84
      %p87 = scmp.ne.s32.totalorder %s70, %s86
      %p88 = scmp.eq.s32.totalorder %s22, 0
      %p89 = por %p87, %p88
      %s90 = ssub.s32 %s23, %s35
      %p91 = scmp.eq.s32.totalorder %s90, 0
      %s93 = sadd.s32 %s92, 1
      %s94 = scalar_select %p91, %s92, %s93
      %p97 = pneg %p91
      %p98 = scmp.eq.s32.totalorder %s16, 1
      %p99 = por %p97, %p98
      %p100 = scmp.ne.s32.totalorder %s92, %s95
      %p101 = scmp.eq.s32.totalorder %s16, 0
      %p102 = por %p100, %p101
      %p103 = scmp.ne.s32.totalorder %s92, %s95
      %p104 = scmp.eq.s32.totalorder %s21, 1
      %p105 = por %p103, %p104
      %p106 = scmp.ne.s32.totalorder %s95, %s96
      %p107 = scmp.eq.s32.totalorder %s21, 0
      %p108 = por %p106, %p107
      %p109 = scmp.ne.s32.totalorder %s95, %s96
      %p110 = scmp.eq.s32.totalorder %s22, 1
      %p111 = por %p109, %p110
      %p113 = scmp.ne.s32.totalorder %s96, %s112
      %p114 = scmp.eq.s32.totalorder %s22, 0
      %p115 = por %p113, %p114
      %s116 = ssub.s32 %s23, %s35
      %s117 = ssub.s32 %s24, %s31
      %s118 = sor.u32 %s116, %s117
      %p119 = scmp.eq.s32.totalorder %s118, 0
      %s121 = sadd.s32 %s120, 1
      %s122 = scalar_select %p119, %s120, %s121
      %p125 = pneg %p119
      %p126 = scmp.eq.s32.totalorder %s16, 1
      %p127 = por %p125, %p126
      %p128 = scmp.ne.s32.totalorder %s120, %s123
      %p129 = scmp.eq.s32.totalorder %s16, 0
      %p130 = por %p128, %p129
      %p131 = scmp.ne.s32.totalorder %s120, %s123
      %p132 = scmp.eq.s32.totalorder %s21, 1
      %p133 = por %p131, %p132
      %p134 = scmp.ne.s32.totalorder %s123, %s124
      %p135 = scmp.eq.s32.totalorder %s21, 0
      %p136 = por %p134, %p135
      %p137 = scmp.ne.s32.totalorder %s123, %s124
      %p138 = scmp.eq.s32.totalorder %s22, 1
      %p139 = por %p137, %p138
      %p141 = scmp.ne.s32.totalorder %s124, %s140
      %p142 = scmp.eq.s32.totalorder %s22, 0
      %p143 = por %p141, %p142
      %s145 = sadd.s32 %s144, 1
      %p148 = scmp.eq.s32.totalorder %s16, 1
      %p149 = scmp.ne.s32.totalorder %s144, %s146
      %p150 = scmp.eq.s32.totalorder %s16, 0
      %p151 = por %p149, %p150
      %p152 = scmp.ne.s32.totalorder %s144, %s146
      %p153 = scmp.eq.s32.totalorder %s21, 1
      %p154 = por %p152, %p153
      %p155 = scmp.ne.s32.totalorder %s146, %s147
      %p156 = scmp.eq.s32.totalorder %s21, 0
      %p157 = por %p155, %p156
      %p158 = scmp.ne.s32.totalorder %s146, %s147
      %p159 = scmp.eq.s32.totalorder %s22, 1
      %p160 = por %p158, %p159
      %p162 = scmp.ne.s32.totalorder %s147, %s161
      %p163 = scmp.eq.s32.totalorder %s22, 0
      %p164 = por %p162, %p163
      %s165 = ssub.s32 %s23, %s35
      %s166 = ssub.s32 %s24, %s31
      %s167 = sor.u32 %s165, %s166
      %p168 = scmp.eq.s32.totalorder %s167, 0
      %s170 = sadd.s32 %s169, 1
      %s171 = scalar_select %p168, %s169, %s170
      %p174 = pneg %p168
      %p175 = scmp.eq.s32.totalorder %s16, 1
      %p176 = por %p174, %p175
      %p177 = scmp.ne.s32.totalorder %s169, %s172
      %p178 = scmp.eq.s32.totalorder %s16, 0
      %p179 = por %p177, %p178
      %p180 = scmp.ne.s32.totalorder %s169, %s172
      %p181 = scmp.eq.s32.totalorder %s21, 1
      %p182 = por %p180, %p181
      %p183 = scmp.ne.s32.totalorder %s172, %s173
      %p184 = scmp.eq.s32.totalorder %s21, 0
      %p185 = por %p183, %p184
      %p186 = scmp.ne.s32.totalorder %s172, %s173
      %p187 = scmp.eq.s32.totalorder %s22, 1
      %p188 = por %p186, %p187
      %p190 = scmp.ne.s32.totalorder %s173, %s189
      %p191 = scmp.eq.s32.totalorder %s22, 0
      %p192 = por %p190, %p191
      %p193 = scmp.le.s32.totalorder 1, %s16
      %p194 = scmp.lt.s32.totalorder %s16, 3
      %p195 = pnand %p193, %p194
      %p196 = pneg %p195
      // Predicated region
      $region9: #{self_attention.7} parent=5 // pred_check
        _
      $region10: #{self_attention.7} parent=5 // pred_check_branch
        %198 = sbr.rel (%p195) target = $region12
      $region11: #{self_attention.7} parent=5 // pred_region
        %s199 = ssub.s32 %s16, 1
        // Predicated region
        $region13: #{self_attention.7} parent=11 // pred_check
          %p200 = pneg %p157
        $region14: #{self_attention.7} parent=11 // pred_check_branch
          %202 = sbr.rel (%p200) target = $region16
        $region15: #{self_attention.7} parent=11 // pred_region
          _
        $region16: #{self_attention.7} parent=11 // pred_fallthru
          _
      $region12: #{self_attention.7} parent=5 // pred_fallthru
        _
      %p203 = scmp.lt.s32.totalorder %s16, 2
      // Predicated region
      $region17: #{self_attention.7} parent=5 // pred_check
        %p204 = pneg %p203
      $region18: #{self_attention.7} parent=5 // pred_check_branch
        %206 = sbr.rel (%p204) target = $region20
      $region19: #{self_attention.7} parent=5 // pred_region
        // Predicated region
        $region21: #{self_attention.7} parent=19 // pred_check
          %p207 = pneg %p50
        $region22: #{self_attention.7} parent=19 // pred_check_branch
          %209 = sbr.rel (%p207) target = $region24
        $region23: #{self_attention.7} parent=19 // pred_region
          %s210 = smul.u32 32, %s24
          %p211 = scmp.lt.s32.totalorder %s23, 1
          %s212 = scalar_select %p211, %s23, 1
          %p213 = scmp.lt.s32.totalorder %s210, 31
          %s214 = scalar_select %p213, %s210, 31
          %s215 = smul.addr %s212, 32
          %s216 = sadd.s32 %s214, %s215
          %s217 = smul.addr %s216, 4
          %s218 = scalar_lea.vmem %s0, %s217
          %s219 = smul.u32 32, %s24
        $region24: #{self_attention.7} parent=19 // pred_fallthru
          _
        // Predicated region
        $region25: #{self_attention.7} parent=19 // pred_check
          %p220 = pneg %p76
        $region26: #{self_attention.7} parent=19 // pred_check_branch
          %222 = sbr.rel (%p220) target = $region28
        $region27: #{self_attention.7} parent=19 // pred_region
          %p223 = scmp.lt.s32.totalorder %s23, 1
          %s224 = scalar_select %p223, %s23, 1
          %s225 = smul.addr %s224, 32
          %s226 = smul.addr %s225, 4
          %s227 = scalar_lea.vmem %s1, %s226
        $region28: #{self_attention.7} parent=19 // pred_fallthru
          _
        // Predicated region
        $region29: #{self_attention.7} parent=19 // pred_check
          %p228 = pneg %p102
        $region30: #{self_attention.7} parent=19 // pred_check_branch
          %230 = sbr.rel (%p228) target = $region32
        $region31: #{self_attention.7} parent=19 // pred_region
          %p231 = scmp.lt.s32.totalorder %s23, 1
          %s232 = scalar_select %p231, %s23, 1
          %s233 = smul.addr %s232, 32
          %s234 = smul.addr %s233, 4
          %s235 = scalar_lea.vmem %s2, %s234
        $region32: #{self_attention.7} parent=19 // pred_fallthru
          _
        // Predicated region
        $region33: #{self_attention.7} parent=19 // pred_check
          %p236 = pneg %p130
        $region34: #{self_attention.7} parent=19 // pred_check_branch
          %238 = sbr.rel (%p236) target = $region36
        $region35: #{self_attention.7} parent=19 // pred_region
          %s239 = smul.u32 32, %s24
          %p240 = scmp.lt.s32.totalorder %s23, 1
          %s241 = scalar_select %p240, %s23, 1
          %p242 = scmp.lt.s32.totalorder %s239, 31
          %s243 = scalar_select %p242, %s239, 31
          %s244 = smul.addr %s241, 32
          %s245 = sadd.s32 %s243, %s244
          %s246 = smul.addr %s245, 8
          %s247 = scalar_lea.vmem %s3, %s246
          %s248 = smul.u32 32, %s24
        $region36: #{self_attention.7} parent=19 // pred_fallthru
          _
      $region20: #{self_attention.7} parent=5 // pred_fallthru
        _
      %p249 = scmp.le.s32.totalorder 1, %s16
      %p250 = scmp.lt.s32.totalorder %s16, 3
      %p251 = pnand %p249, %p250
      %p252 = pneg %p251
      // Predicated region
      $region37: #{self_attention.7} parent=5 // pred_check
        _
      $region38: #{self_attention.7} parent=5 // pred_check_branch
        %254 = sbr.rel (%p251) target = $region40
      $region39: #{self_attention.7} parent=5 // pred_region
        %s255 = ssub.s32 %s16, 1
        %s256 = smul.u32 32, %s26
        %p257 = scmp.lt.s32.totalorder %s25, 1
        %s258 = scalar_select %p257, %s25, 1
        %p259 = scmp.lt.s32.totalorder %s256, 31
        %s260 = scalar_select %p259, %s256, 31
        %s261 = smul.addr %s258, 32
        %s262 = sadd.s32 %s260, %s261
        %s263 = smul.addr %s262, 4
        %s264 = scalar_lea.vmem %s0, %s263
        %p265 = pneg %p56
        %p266 = pneg %p53
        %p267 = scmp.lt.s32.totalorder %s25, 1
        %s268 = scalar_select %p267, %s25, 1
        %s269 = smul.addr %s268, 32
        %s270 = smul.addr %s269, 4
        %s271 = scalar_lea.vmem %s1, %s270
        %p272 = pneg %p82
        %p273 = pneg %p79
        %p274 = scmp.lt.s32.totalorder %s25, 1
        %s275 = scalar_select %p274, %s25, 1
        %s276 = smul.addr %s275, 32
        %s277 = smul.addr %s276, 4
        %s278 = scalar_lea.vmem %s2, %s277
        %p279 = pneg %p108
        %p280 = pneg %p105
        %s281 = smul.u32 32, %s26
        %p282 = scmp.lt.s32.totalorder %s25, 1
        %s283 = scalar_select %p282, %s25, 1
        %p284 = scmp.lt.s32.totalorder %s281, 31
        %s285 = scalar_select %p284, %s281, 31
        %s286 = smul.addr %s283, 32
        %s287 = sadd.s32 %s285, %s286
        %s288 = smul.addr %s287, 8
        %s289 = scalar_lea.vmem %s3, %s288
        %p290 = pneg %p136
        %p291 = pneg %p133
        %p292 = pneg %p157
        %p293 = pneg %p154
        %p294 = pneg %p185
        %p295 = pneg %p182
        %s296 = sand.u32 %s172, 1
        %s297 = scalar_lea.sflag [#allocation4], %s296
        %s298 = sand.u32 %s172, 1
        %s299 = smul.addr %s298, 256
        %s300 = scalar_lea.vmem [#allocation3], %s299
        %s301 = smul.u32 32, %s26
        %p302 = scmp.lt.s32.totalorder %s25, 1
        %s303 = scalar_select %p302, %s25, 1
        %p304 = scmp.lt.s32.totalorder %s301, 31
        %s305 = scalar_select %p304, %s301, 31
        %s306 = smul.addr %s303, 32
        %s307 = sadd.s32 %s305, %s306
        %s308 = smul.addr %s307, 4
        %s309 = scalar_lea.vmem %s0, %s308
        %s310 = smul.u32 32, %s26
        %p311 = scmp.lt.s32.totalorder %s25, 1
        %s312 = scalar_select %p311, %s25, 1
        %s313 = smul.addr %s312, 32
        %s314 = smul.addr %s313, 4
        %s315 = scalar_lea.vmem %s1, %s314
        %p316 = scmp.lt.s32.totalorder %s25, 1
        %s317 = scalar_select %p316, %s25, 1
        %s318 = smul.addr %s317, 32
        %s319 = smul.addr %s318, 4
        %s320 = scalar_lea.vmem %s2, %s319
        %s321 = smul.u32 32, %s26
        %p322 = scmp.lt.s32.totalorder %s25, 1
        %s323 = scalar_select %p322, %s25, 1
        %p324 = scmp.lt.s32.totalorder %s321, 31
        %s325 = scalar_select %p324, %s321, 31
        %s326 = smul.addr %s323, 32
        %s327 = sadd.s32 %s325, %s326
        %s328 = smul.addr %s327, 8
        %s329 = scalar_lea.vmem %s3, %s328
        %s330 = smul.u32 32, %s26
        %s331 = smul.u32 32, %s26
        %v332 = vld [vmem:[%s309] sm:$0xf]
        %v333 = vld [vmem:[%s309 + $0x4] sm:$0xf]
        %v334 = vld [vmem:[%s309 + $0x8] sm:$0xf]
        %v335 = vld [vmem:[%s309 + $0xc] sm:$0xf]
        %v336 = vld [vmem:[%s309 + $0x10] sm:$0xf]
        %v337 = vld [vmem:[%s309 + $0x14] sm:$0xf]
        %v338 = vld [vmem:[%s309 + $0x18] sm:$0xf]
        %v339 = vld [vmem:[%s309 + $0x1c] sm:$0xf]
        %v340 = vld [vmem:[%s309 + $0x20] sm:$0xf]
        %v341 = vld [vmem:[%s309 + $0x24] sm:$0xf]
        %v342 = vld [vmem:[%s309 + $0x28] sm:$0xf]
        %v343 = vld [vmem:[%s309 + $0x2c] sm:$0xf]
        %v344 = vld [vmem:[%s309 + $0x30] sm:$0xf]
        %v345 = vld [vmem:[%s309 + $0x34] sm:$0xf]
        %v346 = vld [vmem:[%s309 + $0x38] sm:$0xf]
        %v347 = vld [vmem:[%s309 + $0x3c] sm:$0xf]
        %v348 = vld [vmem:[%s309 + $0x40] sm:$0xf]
        %v349 = vld [vmem:[%s309 + $0x44] sm:$0xf]
        %v350 = vld [vmem:[%s309 + $0x48] sm:$0xf]
        %v351 = vld [vmem:[%s309 + $0x4c] sm:$0xf]
        %v352 = vld [vmem:[%s309 + $0x50] sm:$0xf]
        %v353 = vld [vmem:[%s309 + $0x54] sm:$0xf]
        %v354 = vld [vmem:[%s309 + $0x58] sm:$0xf]
        %v355 = vld [vmem:[%s309 + $0x5c] sm:$0xf]
        %v356 = vld [vmem:[%s309 + $0x60] sm:$0xf]
        %v357 = vld [vmem:[%s309 + $0x64] sm:$0xf]
        %v358 = vld [vmem:[%s309 + $0x68] sm:$0xf]
        %v359 = vld [vmem:[%s309 + $0x6c] sm:$0xf]
        %v360 = vld [vmem:[%s309 + $0x70] sm:$0xf]
        %v361 = vld [vmem:[%s309 + $0x74] sm:$0xf]
        %v362 = vld [vmem:[%s309 + $0x78] sm:$0xf]
        %v363 = vld [vmem:[%s309 + $0x7c] sm:$0xf]
        %v364 = vld [vmem:[%s315] sm:$0xf]
        %v365 = vld [vmem:[%s315 + $0x4] sm:$0xf]
        %v366 = vld [vmem:[%s315 + $0x8] sm:$0xf]
        %v367 = vld [vmem:[%s315 + $0xc] sm:$0xf]
        %v368 = vld [vmem:[%s315 + $0x10] sm:$0xf]
        %v369 = vld [vmem:[%s315 + $0x14] sm:$0xf]
        %v370 = vld [vmem:[%s315 + $0x18] sm:$0xf]
        %v371 = vld [vmem:[%s315 + $0x1c] sm:$0xf]
        %v372 = vld [vmem:[%s315 + $0x20] sm:$0xf]
        %v373 = vld [vmem:[%s315 + $0x24] sm:$0xf]
        %v374 = vld [vmem:[%s315 + $0x28] sm:$0xf]
        %v375 = vld [vmem:[%s315 + $0x2c] sm:$0xf]
        %v376 = vld [vmem:[%s315 + $0x30] sm:$0xf]
        %v377 = vld [vmem:[%s315 + $0x34] sm:$0xf]
        %v378 = vld [vmem:[%s315 + $0x38] sm:$0xf]
        %v379 = vld [vmem:[%s315 + $0x3c] sm:$0xf]
        %v380 = vld [vmem:[%s315 + $0x40] sm:$0xf]
        %v381 = vld [vmem:[%s315 + $0x44] sm:$0xf]
        %v382 = vld [vmem:[%s315 + $0x48] sm:$0xf]
        %v383 = vld [vmem:[%s315 + $0x4c] sm:$0xf]
        %v384 = vld [vmem:[%s315 + $0x50] sm:$0xf]
        %v385 = vld [vmem:[%s315 + $0x54] sm:$0xf]
        %v386 = vld [vmem:[%s315 + $0x58] sm:$0xf]
        %v387 = vld [vmem:[%s315 + $0x5c] sm:$0xf]
        %v388 = vld [vmem:[%s315 + $0x60] sm:$0xf]
        %v389 = vld [vmem:[%s315 + $0x64] sm:$0xf]
        %v390 = vld [vmem:[%s315 + $0x68] sm:$0xf]
        %v391 = vld [vmem:[%s315 + $0x6c] sm:$0xf]
        %v392 = vld [vmem:[%s315 + $0x70] sm:$0xf]
        %v393 = vld [vmem:[%s315 + $0x74] sm:$0xf]
        %v394 = vld [vmem:[%s315 + $0x78] sm:$0xf]
        %v395 = vld [vmem:[%s315 + $0x7c] sm:$0xf]
        %v396 = vld [vmem:[%s320] sm:$0xf]
        %v397 = vld [vmem:[%s320 + $0x4] sm:$0xf]
        %v398 = vld [vmem:[%s320 + $0x8] sm:$0xf]
        %v399 = vld [vmem:[%s320 + $0xc] sm:$0xf]
        %v400 = vld [vmem:[%s320 + $0x10] sm:$0xf]
        %v401 = vld [vmem:[%s320 + $0x14] sm:$0xf]
        %v402 = vld [vmem:[%s320 + $0x18] sm:$0xf]
        %v403 = vld [vmem:[%s320 + $0x1c] sm:$0xf]
        %v404 = vld [vmem:[%s320 + $0x20] sm:$0xf]
        %v405 = vld [vmem:[%s320 + $0x24] sm:$0xf]
        %v406 = vld [vmem:[%s320 + $0x28] sm:$0xf]
        %v407 = vld [vmem:[%s320 + $0x2c] sm:$0xf]
        %v408 = vld [vmem:[%s320 + $0x30] sm:$0xf]
        %v409 = vld [vmem:[%s320 + $0x34] sm:$0xf]
        %v410 = vld [vmem:[%s320 + $0x38] sm:$0xf]
        %v411 = vld [vmem:[%s320 + $0x3c] sm:$0xf]
        %v412 = vld [vmem:[%s320 + $0x40] sm:$0xf]
        %v413 = vld [vmem:[%s320 + $0x44] sm:$0xf]
        %v414 = vld [vmem:[%s320 + $0x48] sm:$0xf]
        %v415 = vld [vmem:[%s320 + $0x4c] sm:$0xf]
        %v416 = vld [vmem:[%s320 + $0x50] sm:$0xf]
        %v417 = vld [vmem:[%s320 + $0x54] sm:$0xf]
        %v418 = vld [vmem:[%s320 + $0x58] sm:$0xf]
        %v419 = vld [vmem:[%s320 + $0x5c] sm:$0xf]
        %v420 = vld [vmem:[%s320 + $0x60] sm:$0xf]
        %v421 = vld [vmem:[%s320 + $0x64] sm:$0xf]
        %v422 = vld [vmem:[%s320 + $0x68] sm:$0xf]
        %v423 = vld [vmem:[%s320 + $0x6c] sm:$0xf]
        %v424 = vld [vmem:[%s320 + $0x70] sm:$0xf]
        %v425 = vld [vmem:[%s320 + $0x74] sm:$0xf]
        %v426 = vld [vmem:[%s320 + $0x78] sm:$0xf]
        %v427 = vld [vmem:[%s320 + $0x7c] sm:$0xf]
        %v460 = vunpack.c.l.b16 %v332
        %v461 = vunpack.c.l.b16 %v333
        %v462 = vunpack.c.l.b16 %v334
        %v463 = vunpack.c.l.b16 %v335
        %v464 = vunpack.c.l.b16 %v336
        %v465 = vunpack.c.l.b16 %v337
        %v466 = vunpack.c.l.b16 %v338
        %v467 = vunpack.c.l.b16 %v339
        %v468 = vunpack.c.l.b16 %v340
        %v469 = vunpack.c.l.b16 %v341
        %v470 = vunpack.c.l.b16 %v342
        %v471 = vunpack.c.l.b16 %v343
        %v472 = vunpack.c.l.b16 %v344
        %v473 = vunpack.c.l.b16 %v345
        %v474 = vunpack.c.l.b16 %v346
        %v475 = vunpack.c.l.b16 %v347
        %v476 = vunpack.c.l.b16 %v348
        %v477 = vunpack.c.l.b16 %v349
        %v478 = vunpack.c.l.b16 %v350
        %v479 = vunpack.c.l.b16 %v351
        %v480 = vunpack.c.l.b16 %v352
        %v481 = vunpack.c.l.b16 %v353
        %v482 = vunpack.c.l.b16 %v354
        %v483 = vunpack.c.l.b16 %v355
        %v484 = vunpack.c.l.b16 %v356
        %v485 = vunpack.c.l.b16 %v357
        %v486 = vunpack.c.l.b16 %v358
        %v487 = vunpack.c.l.b16 %v359
        %v488 = vunpack.c.l.b16 %v360
        %v489 = vunpack.c.l.b16 %v361
        %v490 = vunpack.c.l.b16 %v362
        %v491 = vunpack.c.l.b16 %v363
        %v492 = vpack.c.b16 %v461, %v460
        %v493 = vpack.c.b16 %v463, %v462
        %v494 = vpack.c.b16 %v465, %v464
        %v495 = vpack.c.b16 %v467, %v466
        %v496 = vpack.c.b16 %v469, %v468
        %v497 = vpack.c.b16 %v471, %v470
        %v498 = vpack.c.b16 %v473, %v472
        %v499 = vpack.c.b16 %v475, %v474
        %v500 = vpack.c.b16 %v477, %v476
        %v501 = vpack.c.b16 %v479, %v478
        %v502 = vpack.c.b16 %v481, %v480
        %v503 = vpack.c.b16 %v483, %v482
        %v504 = vpack.c.b16 %v485, %v484
        %v505 = vpack.c.b16 %v487, %v486
        %v506 = vpack.c.b16 %v489, %v488
        %v507 = vpack.c.b16 %v491, %v490
        %v540 = vunpack.c.l.b16 %v364
        %v541 = vunpack.c.l.b16 %v365
        %v542 = vunpack.c.l.b16 %v366
        %v543 = vunpack.c.l.b16 %v367
        %v544 = vunpack.c.l.b16 %v368
        %v545 = vunpack.c.l.b16 %v369
        %v546 = vunpack.c.l.b16 %v370
        %v547 = vunpack.c.l.b16 %v371
        %v548 = vunpack.c.l.b16 %v372
        %v549 = vunpack.c.l.b16 %v373
        %v550 = vunpack.c.l.b16 %v374
        %v551 = vunpack.c.l.b16 %v375
        %v552 = vunpack.c.l.b16 %v376
        %v553 = vunpack.c.l.b16 %v377
        %v554 = vunpack.c.l.b16 %v378
        %v555 = vunpack.c.l.b16 %v379
        %v556 = vunpack.c.l.b16 %v380
        %v557 = vunpack.c.l.b16 %v381
        %v558 = vunpack.c.l.b16 %v382
        %v559 = vunpack.c.l.b16 %v383
        %v560 = vunpack.c.l.b16 %v384
        %v561 = vunpack.c.l.b16 %v385
        %v562 = vunpack.c.l.b16 %v386
        %v563 = vunpack.c.l.b16 %v387
        %v564 = vunpack.c.l.b16 %v388
        %v565 = vunpack.c.l.b16 %v389
        %v566 = vunpack.c.l.b16 %v390
        %v567 = vunpack.c.l.b16 %v391
        %v568 = vunpack.c.l.b16 %v392
        %v569 = vunpack.c.l.b16 %v393
        %v570 = vunpack.c.l.b16 %v394
        %v571 = vunpack.c.l.b16 %v395
        %v572 = vpack.c.b16 %v541, %v540
        %v573 = vpack.c.b16 %v543, %v542
        %v574 = vpack.c.b16 %v545, %v544
        %v575 = vpack.c.b16 %v547, %v546
        %v576 = vpack.c.b16 %v549, %v548
        %v577 = vpack.c.b16 %v551, %v550
        %v578 = vpack.c.b16 %v553, %v552
        %v579 = vpack.c.b16 %v555, %v554
        %v580 = vpack.c.b16 %v557, %v556
        %v581 = vpack.c.b16 %v559, %v558
        %v582 = vpack.c.b16 %v561, %v560
        %v583 = vpack.c.b16 %v563, %v562
        %v584 = vpack.c.b16 %v565, %v564
        %v585 = vpack.c.b16 %v567, %v566
        %v586 = vpack.c.b16 %v569, %v568
        %v587 = vpack.c.b16 %v571, %v570
        %vm588 = vcmask 130048
        %v590 = vsel %vm588, %v492, 0
        %v593 = vsel %vm588, %v493, 0
        %v596 = vsel %vm588, %v494, 0
        %v599 = vsel %vm588, %v495, 0
        %v602 = vsel %vm588, %v496, 0
        %v605 = vsel %vm588, %v497, 0
        %v608 = vsel %vm588, %v498, 0
        %v611 = vsel %vm588, %v499, 0
        %v614 = vsel %vm588, %v500, 0
        %v617 = vsel %vm588, %v501, 0
        %v620 = vsel %vm588, %v502, 0
        %v623 = vsel %vm588, %v503, 0
        %v626 = vsel %vm588, %v504, 0
        %v629 = vsel %vm588, %v505, 0
        %v632 = vsel %vm588, %v506, 0
        %v635 = vsel %vm588, %v507, 0
        %v638 = vsel %vm588, %v572, 0
        %v641 = vsel %vm588, %v573, 0
        %v644 = vsel %vm588, %v574, 0
        %v647 = vsel %vm588, %v575, 0
        %v650 = vsel %vm588, %v576, 0
        %v653 = vsel %vm588, %v577, 0
        %v656 = vsel %vm588, %v578, 0
        %v659 = vsel %vm588, %v579, 0
        %v662 = vsel %vm588, %v580, 0
        %v665 = vsel %vm588, %v581, 0
        %v668 = vsel %vm588, %v582, 0
        %v671 = vsel %vm588, %v583, 0
        %v674 = vsel %vm588, %v584, 0
        %v677 = vsel %vm588, %v585, 0
        %v680 = vsel %vm588, %v586, 0
        %v683 = vsel %vm588, %v587, 0
        %685 = vmatpush.bf16.xpose.msra.mxu0 %v659
        %686 = vmatpush.bf16.xpose.msra.mxu0 %v656
        %687 = vmatpush.bf16.xpose.msra.mxu0 %v653
        %688 = vmatpush.bf16.xpose.msra.mxu0 %v650
        %689 = vmatpush.bf16.xpose.msra.mxu0 %v647
        %690 = vmatpush.bf16.xpose.msra.mxu0 %v644
        %691 = vmatpush.bf16.xpose.msra.mxu0 %v641
        %692 = vmatpush.bf16.xpose.msra.mxu0 %v638
        %693 = vmatmul.bf16.gmra.mxu0 %v590
        %v694 = vpop.f32.mrf.mxu0
        %v695 = vadd.f32 0.0, %v694
        %v696 = vpop.f32.mrf.mxu0
        %v697 = vadd.f32 0.0, %v696
        %698 = vmatmul.bf16.gmra.mxu0 %v593
        %v699 = vpop.f32.mrf.mxu0
        %v700 = vadd.f32 0.0, %v699
        %v701 = vpop.f32.mrf.mxu0
        %v702 = vadd.f32 0.0, %v701
        %703 = vmatmul.bf16.gmra.mxu0 %v596
        %v704 = vpop.f32.mrf.mxu0
        %v705 = vadd.f32 0.0, %v704
        %v706 = vpop.f32.mrf.mxu0
        %v707 = vadd.f32 0.0, %v706
        %708 = vmatmul.bf16.gmra.mxu0 %v599
        %v709 = vpop.f32.mrf.mxu0
        %v710 = vadd.f32 0.0, %v709
        %v711 = vpop.f32.mrf.mxu0
        %v712 = vadd.f32 0.0, %v711
        %713 = vmatmul.bf16.gmra.mxu0 %v602
        %v714 = vpop.f32.mrf.mxu0
        %v715 = vadd.f32 0.0, %v714
        %v716 = vpop.f32.mrf.mxu0
        %v717 = vadd.f32 0.0, %v716
        %718 = vmatmul.bf16.gmra.mxu0 %v605
        %v719 = vpop.f32.mrf.mxu0
        %v720 = vadd.f32 0.0, %v719
        %v721 = vpop.f32.mrf.mxu0
        %v722 = vadd.f32 0.0, %v721
        %723 = vmatmul.bf16.gmra.mxu0 %v608
        %v724 = vpop.f32.mrf.mxu0
        %v725 = vadd.f32 0.0, %v724
        %v726 = vpop.f32.mrf.mxu0
        %v727 = vadd.f32 0.0, %v726
        %728 = vmatmul.bf16.gmra.mxu0 %v611
        %v729 = vpop.f32.mrf.mxu0
        %v730 = vadd.f32 0.0, %v729
        %v731 = vpop.f32.mrf.mxu0
        %v732 = vadd.f32 0.0, %v731
        %733 = vmatmul.bf16.gmra.mxu0 %v614
        %v734 = vpop.f32.mrf.mxu0
        %v735 = vadd.f32 0.0, %v734
        %v736 = vpop.f32.mrf.mxu0
        %v737 = vadd.f32 0.0, %v736
        %738 = vmatmul.bf16.gmra.mxu0 %v617
        %v739 = vpop.f32.mrf.mxu0
        %v740 = vadd.f32 0.0, %v739
        %v741 = vpop.f32.mrf.mxu0
        %v742 = vadd.f32 0.0, %v741
        %743 = vmatmul.bf16.gmra.mxu0 %v620
        %v744 = vpop.f32.mrf.mxu0
        %v745 = vadd.f32 0.0, %v744
        %v746 = vpop.f32.mrf.mxu0
        %v747 = vadd.f32 0.0, %v746
        %748 = vmatmul.bf16.gmra.mxu0 %v623
        %v749 = vpop.f32.mrf.mxu0
        %v750 = vadd.f32 0.0, %v749
        %v751 = vpop.f32.mrf.mxu0
        %v752 = vadd.f32 0.0, %v751
        %753 = vmatmul.bf16.gmra.mxu0 %v626
        %v754 = vpop.f32.mrf.mxu0
        %v755 = vadd.f32 0.0, %v754
        %v756 = vpop.f32.mrf.mxu0
        %v757 = vadd.f32 0.0, %v756
        %758 = vmatmul.bf16.gmra.mxu0 %v629
        %v759 = vpop.f32.mrf.mxu0
        %v760 = vadd.f32 0.0, %v759
        %v761 = vpop.f32.mrf.mxu0
        %v762 = vadd.f32 0.0, %v761
        %763 = vmatmul.bf16.gmra.mxu0 %v632
        %v764 = vpop.f32.mrf.mxu0
        %v765 = vadd.f32 0.0, %v764
        %v766 = vpop.f32.mrf.mxu0
        %v767 = vadd.f32 0.0, %v766
        %768 = vmatmul.bf16.gmra.mxu0 %v635
        %v769 = vpop.f32.mrf.mxu0
        %v770 = vadd.f32 0.0, %v769
        %v771 = vpop.f32.mrf.mxu0
        %v772 = vadd.f32 0.0, %v771
        %773 = vdwg.mxu0
        %774 = vmatpush.bf16.xpose.msra.mxu0 %v683
        %775 = vmatpush.bf16.xpose.msra.mxu0 %v680
        %776 = vmatpush.bf16.xpose.msra.mxu0 %v677
        %777 = vmatpush.bf16.xpose.msra.mxu0 %v674
        %778 = vmatpush.bf16.xpose.msra.mxu0 %v671
        %779 = vmatpush.bf16.xpose.msra.mxu0 %v668
        %780 = vmatpush.bf16.xpose.msra.mxu0 %v665
        %781 = vmatpush.bf16.xpose.msra.mxu0 %v662
        %782 = vmatmul.bf16.gmra.mxu0 %v590
        %v783 = vpop.f32.mrf.mxu0
        %v784 = vadd.f32 0.0, %v783
        %v785 = vpop.f32.mrf.mxu0
        %v786 = vadd.f32 0.0, %v785
        %787 = vmatmul.bf16.gmra.mxu0 %v593
        %v788 = vpop.f32.mrf.mxu0
        %v789 = vadd.f32 0.0, %v788
        %v790 = vpop.f32.mrf.mxu0
        %v791 = vadd.f32 0.0, %v790
        %792 = vmatmul.bf16.gmra.mxu0 %v596
        %v793 = vpop.f32.mrf.mxu0
        %v794 = vadd.f32 0.0, %v793
        %v795 = vpop.f32.mrf.mxu0
        %v796 = vadd.f32 0.0, %v795
        %797 = vmatmul.bf16.gmra.mxu0 %v599
        %v798 = vpop.f32.mrf.mxu0
        %v799 = vadd.f32 0.0, %v798
        %v800 = vpop.f32.mrf.mxu0
        %v801 = vadd.f32 0.0, %v800
        %802 = vmatmul.bf16.gmra.mxu0 %v602
        %v803 = vpop.f32.mrf.mxu0
        %v804 = vadd.f32 0.0, %v803
        %v805 = vpop.f32.mrf.mxu0
        %v806 = vadd.f32 0.0, %v805
        %807 = vmatmul.bf16.gmra.mxu0 %v605
        %v808 = vpop.f32.mrf.mxu0
        %v809 = vadd.f32 0.0, %v808
        %v810 = vpop.f32.mrf.mxu0
        %v811 = vadd.f32 0.0, %v810
        %812 = vmatmul.bf16.gmra.mxu0 %v608
        %v813 = vpop.f32.mrf.mxu0
        %v814 = vadd.f32 0.0, %v813
        %v815 = vpop.f32.mrf.mxu0
        %v816 = vadd.f32 0.0, %v815
        %817 = vmatmul.bf16.gmra.mxu0 %v611
        %v818 = vpop.f32.mrf.mxu0
        %v819 = vadd.f32 0.0, %v818
        %v820 = vpop.f32.mrf.mxu0
        %v821 = vadd.f32 0.0, %v820
        %822 = vmatmul.bf16.gmra.mxu0 %v614
        %v823 = vpop.f32.mrf.mxu0
        %v824 = vadd.f32 0.0, %v823
        %v825 = vpop.f32.mrf.mxu0
        %v826 = vadd.f32 0.0, %v825
        %827 = vmatmul.bf16.gmra.mxu0 %v617
        %v828 = vpop.f32.mrf.mxu0
        %v829 = vadd.f32 0.0, %v828
        %v830 = vpop.f32.mrf.mxu0
        %v831 = vadd.f32 0.0, %v830
        %832 = vmatmul.bf16.gmra.mxu0 %v620
        %v833 = vpop.f32.mrf.mxu0
        %v834 = vadd.f32 0.0, %v833
        %v835 = vpop.f32.mrf.mxu0
        %v836 = vadd.f32 0.0, %v835
        %837 = vmatmul.bf16.gmra.mxu0 %v623
        %v838 = vpop.f32.mrf.mxu0
        %v839 = vadd.f32 0.0, %v838
        %v840 = vpop.f32.mrf.mxu0
        %v841 = vadd.f32 0.0, %v840
        %842 = vmatmul.bf16.gmra.mxu0 %v626
        %v843 = vpop.f32.mrf.mxu0
        %v844 = vadd.f32 0.0, %v843
        %v845 = vpop.f32.mrf.mxu0
        %v846 = vadd.f32 0.0, %v845
        %847 = vmatmul.bf16.gmra.mxu0 %v629
        %v848 = vpop.f32.mrf.mxu0
        %v849 = vadd.f32 0.0, %v848
        %v850 = vpop.f32.mrf.mxu0
        %v851 = vadd.f32 0.0, %v850
        %852 = vmatmul.bf16.gmra.mxu0 %v632
        %v853 = vpop.f32.mrf.mxu0
        %v854 = vadd.f32 0.0, %v853
        %v855 = vpop.f32.mrf.mxu0
        %v856 = vadd.f32 0.0, %v855
        %857 = vmatmul.bf16.gmra.mxu0 %v635
        %v858 = vpop.f32.mrf.mxu0
        %v859 = vadd.f32 0.0, %v858
        %v860 = vpop.f32.mrf.mxu0
        %v861 = vadd.f32 0.0, %v860
        %862 = vdwg.mxu0
        %v863 = vmax.f32 %v695, %v784
        %864 = vmax.xlane.f32.xlu0 %v863
        %v865 = vpop.xlane.xlu0 %864
        %v866 = vmax.f32 %v697, %v786
        %867 = vmax.xlane.f32.xlu0 %v866
        %v868 = vpop.xlane.xlu0 %867
        %v869 = vmax.f32 %v700, %v789
        %870 = vmax.xlane.f32.xlu0 %v869
        %v871 = vpop.xlane.xlu0 %870
        %v872 = vmax.f32 %v702, %v791
        %873 = vmax.xlane.f32.xlu0 %v872
        %v874 = vpop.xlane.xlu0 %873
        %v875 = vmax.f32 %v705, %v794
        %876 = vmax.xlane.f32.xlu0 %v875
        %v877 = vpop.xlane.xlu0 %876
        %v878 = vmax.f32 %v707, %v796
        %879 = vmax.xlane.f32.xlu0 %v878
        %v880 = vpop.xlane.xlu0 %879
        %v881 = vmax.f32 %v710, %v799
        %882 = vmax.xlane.f32.xlu0 %v881
        %v883 = vpop.xlane.xlu0 %882
        %v884 = vmax.f32 %v712, %v801
        %885 = vmax.xlane.f32.xlu0 %v884
        %v886 = vpop.xlane.xlu0 %885
        %v887 = vmax.f32 %v715, %v804
        %888 = vmax.xlane.f32.xlu0 %v887
        %v889 = vpop.xlane.xlu0 %888
        %v890 = vmax.f32 %v717, %v806
        %891 = vmax.xlane.f32.xlu0 %v890
        %v892 = vpop.xlane.xlu0 %891
        %v893 = vmax.f32 %v720, %v809
        %894 = vmax.xlane.f32.xlu0 %v893
        %v895 = vpop.xlane.xlu0 %894
        %v896 = vmax.f32 %v722, %v811
        %897 = vmax.xlane.f32.xlu0 %v896
        %v898 = vpop.xlane.xlu0 %897
        %v899 = vmax.f32 %v725, %v814
        %900 = vmax.xlane.f32.xlu0 %v899
        %v901 = vpop.xlane.xlu0 %900
        %v902 = vmax.f32 %v727, %v816
        %903 = vmax.xlane.f32.xlu0 %v902
        %v904 = vpop.xlane.xlu0 %903
        %v905 = vmax.f32 %v730, %v819
        %906 = vmax.xlane.f32.xlu0 %v905
        %v907 = vpop.xlane.xlu0 %906
        %v908 = vmax.f32 %v732, %v821
        %909 = vmax.xlane.f32.xlu0 %v908
        %v910 = vpop.xlane.xlu0 %909
        %v911 = vmax.f32 %v735, %v824
        %912 = vmax.xlane.f32.xlu0 %v911
        %v913 = vpop.xlane.xlu0 %912
        %v914 = vmax.f32 %v737, %v826
        %915 = vmax.xlane.f32.xlu0 %v914
        %v916 = vpop.xlane.xlu0 %915
        %v917 = vmax.f32 %v740, %v829
        %918 = vmax.xlane.f32.xlu0 %v917
        %v919 = vpop.xlane.xlu0 %918
        %v920 = vmax.f32 %v742, %v831
        %921 = vmax.xlane.f32.xlu0 %v920
        %v922 = vpop.xlane.xlu0 %921
        %v923 = vmax.f32 %v745, %v834
        %924 = vmax.xlane.f32.xlu0 %v923
        %v925 = vpop.xlane.xlu0 %924
        %v926 = vmax.f32 %v747, %v836
        %927 = vmax.xlane.f32.xlu0 %v926
        %v928 = vpop.xlane.xlu0 %927
        %v929 = vmax.f32 %v750, %v839
        %930 = vmax.xlane.f32.xlu0 %v929
        %v931 = vpop.xlane.xlu0 %930
        %v932 = vmax.f32 %v752, %v841
        %933 = vmax.xlane.f32.xlu0 %v932
        %v934 = vpop.xlane.xlu0 %933
        %v935 = vmax.f32 %v755, %v844
        %936 = vmax.xlane.f32.xlu0 %v935
        %v937 = vpop.xlane.xlu0 %936
        %v938 = vmax.f32 %v757, %v846
        %939 = vmax.xlane.f32.xlu0 %v938
        %v940 = vpop.xlane.xlu0 %939
        %v941 = vmax.f32 %v760, %v849
        %942 = vmax.xlane.f32.xlu0 %v941
        %v943 = vpop.xlane.xlu0 %942
        %v944 = vmax.f32 %v762, %v851
        %945 = vmax.xlane.f32.xlu0 %v944
        %v946 = vpop.xlane.xlu0 %945
        %v947 = vmax.f32 %v765, %v854
        %948 = vmax.xlane.f32.xlu0 %v947
        %v949 = vpop.xlane.xlu0 %948
        %v950 = vmax.f32 %v767, %v856
        %951 = vmax.xlane.f32.xlu0 %v950
        %v952 = vpop.xlane.xlu0 %951
        %v953 = vmax.f32 %v770, %v859
        %954 = vmax.xlane.f32.xlu0 %v953
        %v955 = vpop.xlane.xlu0 %954
        %v956 = vmax.f32 %v772, %v861
        %957 = vmax.xlane.f32.xlu0 %v956
        %v958 = vpop.xlane.xlu0 %957
        %v959 = vsub.f32 %v695, %v865
        %v960 = vsub.f32 %v784, %v865
        %v961 = vsub.f32 %v697, %v868
        %v962 = vsub.f32 %v786, %v868
        %v963 = vsub.f32 %v700, %v871
        %v964 = vsub.f32 %v789, %v871
        %v965 = vsub.f32 %v702, %v874
        %v966 = vsub.f32 %v791, %v874
        %v967 = vsub.f32 %v705, %v877
        %v968 = vsub.f32 %v794, %v877
        %v969 = vsub.f32 %v707, %v880
        %v970 = vsub.f32 %v796, %v880
        %v971 = vsub.f32 %v710, %v883
        %v972 = vsub.f32 %v799, %v883
        %v973 = vsub.f32 %v712, %v886
        %v974 = vsub.f32 %v801, %v886
        %v975 = vsub.f32 %v715, %v889
        %v976 = vsub.f32 %v804, %v889
        %v977 = vsub.f32 %v717, %v892
        %v978 = vsub.f32 %v806, %v892
        %v979 = vsub.f32 %v720, %v895
        %v980 = vsub.f32 %v809, %v895
        %v981 = vsub.f32 %v722, %v898
        %v982 = vsub.f32 %v811, %v898
        %v983 = vsub.f32 %v725, %v901
        %v984 = vsub.f32 %v814, %v901
        %v985 = vsub.f32 %v727, %v904
        %v986 = vsub.f32 %v816, %v904
        %v987 = vsub.f32 %v730, %v907
        %v988 = vsub.f32 %v819, %v907
        %v989 = vsub.f32 %v732, %v910
        %v990 = vsub.f32 %v821, %v910
        %v991 = vsub.f32 %v735, %v913
        %v992 = vsub.f32 %v824, %v913
        %v993 = vsub.f32 %v737, %v916
        %v994 = vsub.f32 %v826, %v916
        %v995 = vsub.f32 %v740, %v919
        %v996 = vsub.f32 %v829, %v919
        %v997 = vsub.f32 %v742, %v922
        %v998 = vsub.f32 %v831, %v922
        %v999 = vsub.f32 %v745, %v925
        %v1000 = vsub.f32 %v834, %v925
        %v1001 = vsub.f32 %v747, %v928
        %v1002 = vsub.f32 %v836, %v928
        %v1003 = vsub.f32 %v750, %v931
        %v1004 = vsub.f32 %v839, %v931
        %v1005 = vsub.f32 %v752, %v934
        %v1006 = vsub.f32 %v841, %v934
        %v1007 = vsub.f32 %v755, %v937
        %v1008 = vsub.f32 %v844, %v937
        %v1009 = vsub.f32 %v757, %v940
        %v1010 = vsub.f32 %v846, %v940
        %v1011 = vsub.f32 %v760, %v943
        %v1012 = vsub.f32 %v849, %v943
        %v1013 = vsub.f32 %v762, %v946
        %v1014 = vsub.f32 %v851, %v946
        %v1015 = vsub.f32 %v765, %v949
        %v1016 = vsub.f32 %v854, %v949
        %v1017 = vsub.f32 %v767, %v952
        %v1018 = vsub.f32 %v856, %v952
        %v1019 = vsub.f32 %v770, %v955
        %v1020 = vsub.f32 %v859, %v955
        %v1021 = vsub.f32 %v772, %v958
        %v1022 = vsub.f32 %v861, %v958
        %v1023 = vmul.f32 %v959, 1.442695
        %v1024 = vpow.pop %v1023
        %v1025 = vmul.f32 %v960, 1.442695
        %v1026 = vpow.pop %v1025
        %v1027 = vmul.f32 %v961, 1.442695
        %v1028 = vpow.pop %v1027
        %v1029 = vmul.f32 %v962, 1.442695
        %v1030 = vpow.pop %v1029
        %v1031 = vmul.f32 %v963, 1.442695
        %v1032 = vpow.pop %v1031
        %v1033 = vmul.f32 %v964, 1.442695
        %v1034 = vpow.pop %v1033
        %v1035 = vmul.f32 %v965, 1.442695
        %v1036 = vpow.pop %v1035
        %v1037 = vmul.f32 %v966, 1.442695
        %v1038 = vpow.pop %v1037
        %v1039 = vmul.f32 %v967, 1.442695
        %v1040 = vpow.pop %v1039
        %v1041 = vmul.f32 %v968, 1.442695
        %v1042 = vpow.pop %v1041
        %v1043 = vmul.f32 %v969, 1.442695
        %v1044 = vpow.pop %v1043
        %v1045 = vmul.f32 %v970, 1.442695
        %v1046 = vpow.pop %v1045
        %v1047 = vmul.f32 %v971, 1.442695
        %v1048 = vpow.pop %v1047
        %v1049 = vmul.f32 %v972, 1.442695
        %v1050 = vpow.pop %v1049
        %v1051 = vmul.f32 %v973, 1.442695
        %v1052 = vpow.pop %v1051
        %v1053 = vmul.f32 %v974, 1.442695
        %v1054 = vpow.pop %v1053
        %v1055 = vmul.f32 %v975, 1.442695
        %v1056 = vpow.pop %v1055
        %v1057 = vmul.f32 %v976, 1.442695
        %v1058 = vpow.pop %v1057
        %v1059 = vmul.f32 %v977, 1.442695
        %v1060 = vpow.pop %v1059
        %v1061 = vmul.f32 %v978, 1.442695
        %v1062 = vpow.pop %v1061
        %v1063 = vmul.f32 %v979, 1.442695
        %v1064 = vpow.pop %v1063
        %v1065 = vmul.f32 %v980, 1.442695
        %v1066 = vpow.pop %v1065
        %v1067 = vmul.f32 %v981, 1.442695
        %v1068 = vpow.pop %v1067
        %v1069 = vmul.f32 %v982, 1.442695
        %v1070 = vpow.pop %v1069
        %v1071 = vmul.f32 %v983, 1.442695
        %v1072 = vpow.pop %v1071
        %v1073 = vmul.f32 %v984, 1.442695
        %v1074 = vpow.pop %v1073
        %v1075 = vmul.f32 %v985, 1.442695
        %v1076 = vpow.pop %v1075
        %v1077 = vmul.f32 %v986, 1.442695
        %v1078 = vpow.pop %v1077
        %v1079 = vmul.f32 %v987, 1.442695
        %v1080 = vpow.pop %v1079
        %v1081 = vmul.f32 %v988, 1.442695
        %v1082 = vpow.pop %v1081
        %v1083 = vmul.f32 %v989, 1.442695
        %v1084 = vpow.pop %v1083
        %v1085 = vmul.f32 %v990, 1.442695
        %v1086 = vpow.pop %v1085
        %v1087 = vmul.f32 %v991, 1.442695
        %v1088 = vpow.pop %v1087
        %v1089 = vmul.f32 %v992, 1.442695
        %v1090 = vpow.pop %v1089
        %v1091 = vmul.f32 %v993, 1.442695
        %v1092 = vpow.pop %v1091
        %v1093 = vmul.f32 %v994, 1.442695
        %v1094 = vpow.pop %v1093
        %v1095 = vmul.f32 %v995, 1.442695
        %v1096 = vpow.pop %v1095
        %v1097 = vmul.f32 %v996, 1.442695
        %v1098 = vpow.pop %v1097
        %v1099 = vmul.f32 %v997, 1.442695
        %v1100 = vpow.pop %v1099
        %v1101 = vmul.f32 %v998, 1.442695
        %v1102 = vpow.pop %v1101
        %v1103 = vmul.f32 %v999, 1.442695
        %v1104 = vpow.pop %v1103
        %v1105 = vmul.f32 %v1000, 1.442695
        %v1106 = vpow.pop %v1105
        %v1107 = vmul.f32 %v1001, 1.442695
        %v1108 = vpow.pop %v1107
        %v1109 = vmul.f32 %v1002, 1.442695
        %v1110 = vpow.pop %v1109
        %v1111 = vmul.f32 %v1003, 1.442695
        %v1112 = vpow.pop %v1111
        %v1113 = vmul.f32 %v1004, 1.442695
        %v1114 = vpow.pop %v1113
        %v1115 = vmul.f32 %v1005, 1.442695
        %v1116 = vpow.pop %v1115
        %v1117 = vmul.f32 %v1006, 1.442695
        %v1118 = vpow.pop %v1117
        %v1119 = vmul.f32 %v1007, 1.442695
        %v1120 = vpow.pop %v1119
        %v1121 = vmul.f32 %v1008, 1.442695
        %v1122 = vpow.pop %v1121
        %v1123 = vmul.f32 %v1009, 1.442695
        %v1124 = vpow.pop %v1123
        %v1125 = vmul.f32 %v1010, 1.442695
        %v1126 = vpow.pop %v1125
        %v1127 = vmul.f32 %v1011, 1.442695
        %v1128 = vpow.pop %v1127
        %v1129 = vmul.f32 %v1012, 1.442695
        %v1130 = vpow.pop %v1129
        %v1131 = vmul.f32 %v1013, 1.442695
        %v1132 = vpow.pop %v1131
        %v1133 = vmul.f32 %v1014, 1.442695
        %v1134 = vpow.pop %v1133
        %v1135 = vmul.f32 %v1015, 1.442695
        %v1136 = vpow.pop %v1135
        %v1137 = vmul.f32 %v1016, 1.442695
        %v1138 = vpow.pop %v1137
        %v1139 = vmul.f32 %v1017, 1.442695
        %v1140 = vpow.pop %v1139
        %v1141 = vmul.f32 %v1018, 1.442695
        %v1142 = vpow.pop %v1141
        %v1143 = vmul.f32 %v1019, 1.442695
        %v1144 = vpow.pop %v1143
        %v1145 = vmul.f32 %v1020, 1.442695
        %v1146 = vpow.pop %v1145
        %v1147 = vmul.f32 %v1021, 1.442695
        %v1148 = vpow.pop %v1147
        %v1149 = vmul.f32 %v1022, 1.442695
        %v1150 = vpow.pop %v1149
        %v1151 = vadd.f32 %v1024, %v1026
        %1152 = vadd.xlane.f32.xlu0 %v1151
        %v1153 = vpop.xlane.xlu0 %1152
        %v1154 = vadd.f32 %v1028, %v1030
        %1155 = vadd.xlane.f32.xlu0 %v1154
        %v1156 = vpop.xlane.xlu0 %1155
        %v1157 = vadd.f32 %v1032, %v1034
        %1158 = vadd.xlane.f32.xlu0 %v1157
        %v1159 = vpop.xlane.xlu0 %1158
        %v1160 = vadd.f32 %v1036, %v1038
        %1161 = vadd.xlane.f32.xlu0 %v1160
        %v1162 = vpop.xlane.xlu0 %1161
        %v1163 = vadd.f32 %v1040, %v1042
        %1164 = vadd.xlane.f32.xlu0 %v1163
        %v1165 = vpop.xlane.xlu0 %1164
        %v1166 = vadd.f32 %v1044, %v1046
        %1167 = vadd.xlane.f32.xlu0 %v1166
        %v1168 = vpop.xlane.xlu0 %1167
        %v1169 = vadd.f32 %v1048, %v1050
        %1170 = vadd.xlane.f32.xlu0 %v1169
        %v1171 = vpop.xlane.xlu0 %1170
        %v1172 = vadd.f32 %v1052, %v1054
        %1173 = vadd.xlane.f32.xlu0 %v1172
        %v1174 = vpop.xlane.xlu0 %1173
        %v1175 = vadd.f32 %v1056, %v1058
        %1176 = vadd.xlane.f32.xlu0 %v1175
        %v1177 = vpop.xlane.xlu0 %1176
        %v1178 = vadd.f32 %v1060, %v1062
        %1179 = vadd.xlane.f32.xlu0 %v1178
        %v1180 = vpop.xlane.xlu0 %1179
        %v1181 = vadd.f32 %v1064, %v1066
        %1182 = vadd.xlane.f32.xlu0 %v1181
        %v1183 = vpop.xlane.xlu0 %1182
        %v1184 = vadd.f32 %v1068, %v1070
        %1185 = vadd.xlane.f32.xlu0 %v1184
        %v1186 = vpop.xlane.xlu0 %1185
        %v1187 = vadd.f32 %v1072, %v1074
        %1188 = vadd.xlane.f32.xlu0 %v1187
        %v1189 = vpop.xlane.xlu0 %1188
        %v1190 = vadd.f32 %v1076, %v1078
        %1191 = vadd.xlane.f32.xlu0 %v1190
        %v1192 = vpop.xlane.xlu0 %1191
        %v1193 = vadd.f32 %v1080, %v1082
        %1194 = vadd.xlane.f32.xlu0 %v1193
        %v1195 = vpop.xlane.xlu0 %1194
        %v1196 = vadd.f32 %v1084, %v1086
        %1197 = vadd.xlane.f32.xlu0 %v1196
        %v1198 = vpop.xlane.xlu0 %1197
        %v1199 = vadd.f32 %v1088, %v1090
        %1200 = vadd.xlane.f32.xlu0 %v1199
        %v1201 = vpop.xlane.xlu0 %1200
        %v1202 = vadd.f32 %v1092, %v1094
        %1203 = vadd.xlane.f32.xlu0 %v1202
        %v1204 = vpop.xlane.xlu0 %1203
        %v1205 = vadd.f32 %v1096, %v1098
        %1206 = vadd.xlane.f32.xlu0 %v1205
        %v1207 = vpop.xlane.xlu0 %1206
        %v1208 = vadd.f32 %v1100, %v1102
        %1209 = vadd.xlane.f32.xlu0 %v1208
        %v1210 = vpop.xlane.xlu0 %1209
        %v1211 = vadd.f32 %v1104, %v1106
        %1212 = vadd.xlane.f32.xlu0 %v1211
        %v1213 = vpop.xlane.xlu0 %1212
        %v1214 = vadd.f32 %v1108, %v1110
        %1215 = vadd.xlane.f32.xlu0 %v1214
        %v1216 = vpop.xlane.xlu0 %1215
        %v1217 = vadd.f32 %v1112, %v1114
        %1218 = vadd.xlane.f32.xlu0 %v1217
        %v1219 = vpop.xlane.xlu0 %1218
        %v1220 = vadd.f32 %v1116, %v1118
        %1221 = vadd.xlane.f32.xlu0 %v1220
        %v1222 = vpop.xlane.xlu0 %1221
        %v1223 = vadd.f32 %v1120, %v1122
        %1224 = vadd.xlane.f32.xlu0 %v1223
        %v1225 = vpop.xlane.xlu0 %1224
        %v1226 = vadd.f32 %v1124, %v1126
        %1227 = vadd.xlane.f32.xlu0 %v1226
        %v1228 = vpop.xlane.xlu0 %1227
        %v1229 = vadd.f32 %v1128, %v1130
        %1230 = vadd.xlane.f32.xlu0 %v1229
        %v1231 = vpop.xlane.xlu0 %1230
        %v1232 = vadd.f32 %v1132, %v1134
        %1233 = vadd.xlane.f32.xlu0 %v1232
        %v1234 = vpop.xlane.xlu0 %1233
        %v1235 = vadd.f32 %v1136, %v1138
        %1236 = vadd.xlane.f32.xlu0 %v1235
        %v1237 = vpop.xlane.xlu0 %1236
        %v1238 = vadd.f32 %v1140, %v1142
        %1239 = vadd.xlane.f32.xlu0 %v1238
        %v1240 = vpop.xlane.xlu0 %1239
        %v1241 = vadd.f32 %v1144, %v1146
        %1242 = vadd.xlane.f32.xlu0 %v1241
        %v1243 = vpop.xlane.xlu0 %1242
        %v1244 = vadd.f32 %v1148, %v1150
        %1245 = vadd.xlane.f32.xlu0 %v1244
        %v1246 = vpop.xlane.xlu0 %1245
        %v1247 = vrcp.pop %v1153
        %v1248 = vrcp.pop %v1156
        %v1249 = vrcp.pop %v1159
        %v1250 = vrcp.pop %v1162
        %v1251 = vrcp.pop %v1165
        %v1252 = vrcp.pop %v1168
        %v1253 = vrcp.pop %v1171
        %v1254 = vrcp.pop %v1174
        %v1255 = vrcp.pop %v1177
        %v1256 = vrcp.pop %v1180
        %v1257 = vrcp.pop %v1183
        %v1258 = vrcp.pop %v1186
        %v1259 = vrcp.pop %v1189
        %v1260 = vrcp.pop %v1192
        %v1261 = vrcp.pop %v1195
        %v1262 = vrcp.pop %v1198
        %v1263 = vrcp.pop %v1201
        %v1264 = vrcp.pop %v1204
        %v1265 = vrcp.pop %v1207
        %v1266 = vrcp.pop %v1210
        %v1267 = vrcp.pop %v1213
        %v1268 = vrcp.pop %v1216
        %v1269 = vrcp.pop %v1219
        %v1270 = vrcp.pop %v1222
        %v1271 = vrcp.pop %v1225
        %v1272 = vrcp.pop %v1228
        %v1273 = vrcp.pop %v1231
        %v1274 = vrcp.pop %v1234
        %v1275 = vrcp.pop %v1237
        %v1276 = vrcp.pop %v1240
        %v1277 = vrcp.pop %v1243
        %v1278 = vrcp.pop %v1246
        %v1279 = vmul.f32 %v1024, %v1247
        %v1280 = vmul.f32 %v1026, %v1247
        %v1281 = vmul.f32 %v1028, %v1248
        %v1282 = vmul.f32 %v1030, %v1248
        %v1283 = vmul.f32 %v1032, %v1249
        %v1284 = vmul.f32 %v1034, %v1249
        %v1285 = vmul.f32 %v1036, %v1250
        %v1286 = vmul.f32 %v1038, %v1250
        %v1287 = vmul.f32 %v1040, %v1251
        %v1288 = vmul.f32 %v1042, %v1251
        %v1289 = vmul.f32 %v1044, %v1252
        %v1290 = vmul.f32 %v1046, %v1252
        %v1291 = vmul.f32 %v1048, %v1253
        %v1292 = vmul.f32 %v1050, %v1253
        %v1293 = vmul.f32 %v1052, %v1254
        %v1294 = vmul.f32 %v1054, %v1254
        %v1295 = vmul.f32 %v1056, %v1255
        %v1296 = vmul.f32 %v1058, %v1255
        %v1297 = vmul.f32 %v1060, %v1256
        %v1298 = vmul.f32 %v1062, %v1256
        %v1299 = vmul.f32 %v1064, %v1257
        %v1300 = vmul.f32 %v1066, %v1257
        %v1301 = vmul.f32 %v1068, %v1258
        %v1302 = vmul.f32 %v1070, %v1258
        %v1303 = vmul.f32 %v1072, %v1259
        %v1304 = vmul.f32 %v1074, %v1259
        %v1305 = vmul.f32 %v1076, %v1260
        %v1306 = vmul.f32 %v1078, %v1260
        %v1307 = vmul.f32 %v1080, %v1261
        %v1308 = vmul.f32 %v1082, %v1261
        %v1309 = vmul.f32 %v1084, %v1262
        %v1310 = vmul.f32 %v1086, %v1262
        %v1311 = vmul.f32 %v1088, %v1263
        %v1312 = vmul.f32 %v1090, %v1263
        %v1313 = vmul.f32 %v1092, %v1264
        %v1314 = vmul.f32 %v1094, %v1264
        %v1315 = vmul.f32 %v1096, %v1265
        %v1316 = vmul.f32 %v1098, %v1265
        %v1317 = vmul.f32 %v1100, %v1266
        %v1318 = vmul.f32 %v1102, %v1266
        %v1319 = vmul.f32 %v1104, %v1267
        %v1320 = vmul.f32 %v1106, %v1267
        %v1321 = vmul.f32 %v1108, %v1268
        %v1322 = vmul.f32 %v1110, %v1268
        %v1323 = vmul.f32 %v1112, %v1269
        %v1324 = vmul.f32 %v1114, %v1269
        %v1325 = vmul.f32 %v1116, %v1270
        %v1326 = vmul.f32 %v1118, %v1270
        %v1327 = vmul.f32 %v1120, %v1271
        %v1328 = vmul.f32 %v1122, %v1271
        %v1329 = vmul.f32 %v1124, %v1272
        %v1330 = vmul.f32 %v1126, %v1272
        %v1331 = vmul.f32 %v1128, %v1273
        %v1332 = vmul.f32 %v1130, %v1273
        %v1333 = vmul.f32 %v1132, %v1274
        %v1334 = vmul.f32 %v1134, %v1274
        %v1335 = vmul.f32 %v1136, %v1275
        %v1336 = vmul.f32 %v1138, %v1275
        %v1337 = vmul.f32 %v1140, %v1276
        %v1338 = vmul.f32 %v1142, %v1276
        %v1339 = vmul.f32 %v1144, %v1277
        %v1340 = vmul.f32 %v1146, %v1277
        %v1341 = vmul.f32 %v1148, %v1278
        %v1342 = vmul.f32 %v1150, %v1278
        %v1343 = vpack.c.bf16 %v1281, %v1279
        %v1344 = vpack.c.bf16 %v1282, %v1280
        %v1345 = vpack.c.bf16 %v1285, %v1283
        %v1346 = vpack.c.bf16 %v1286, %v1284
        %v1347 = vpack.c.bf16 %v1289, %v1287
        %v1348 = vpack.c.bf16 %v1290, %v1288
        %v1349 = vpack.c.bf16 %v1293, %v1291
        %v1350 = vpack.c.bf16 %v1294, %v1292
        %v1351 = vpack.c.bf16 %v1297, %v1295
        %v1352 = vpack.c.bf16 %v1298, %v1296
        %v1353 = vpack.c.bf16 %v1301, %v1299
        %v1354 = vpack.c.bf16 %v1302, %v1300
        %v1355 = vpack.c.bf16 %v1305, %v1303
        %v1356 = vpack.c.bf16 %v1306, %v1304
        %v1357 = vpack.c.bf16 %v1309, %v1307
        %v1358 = vpack.c.bf16 %v1310, %v1308
        %v1359 = vpack.c.bf16 %v1313, %v1311
        %v1360 = vpack.c.bf16 %v1314, %v1312
        %v1361 = vpack.c.bf16 %v1317, %v1315
        %v1362 = vpack.c.bf16 %v1318, %v1316
        %v1363 = vpack.c.bf16 %v1321, %v1319
        %v1364 = vpack.c.bf16 %v1322, %v1320
        %v1365 = vpack.c.bf16 %v1325, %v1323
        %v1366 = vpack.c.bf16 %v1326, %v1324
        %v1367 = vpack.c.bf16 %v1329, %v1327
        %v1368 = vpack.c.bf16 %v1330, %v1328
        %v1369 = vpack.c.bf16 %v1333, %v1331
        %v1370 = vpack.c.bf16 %v1334, %v1332
        %v1371 = vpack.c.bf16 %v1337, %v1335
        %v1372 = vpack.c.bf16 %v1338, %v1336
        %v1373 = vpack.c.bf16 %v1341, %v1339
        %v1374 = vpack.c.bf16 %v1342, %v1340
        %v1407 = vunpack.c.l.b16 %v396
        %v1408 = vunpack.c.l.b16 %v397
        %v1409 = vunpack.c.l.b16 %v398
        %v1410 = vunpack.c.l.b16 %v399
        %v1411 = vunpack.c.l.b16 %v400
        %v1412 = vunpack.c.l.b16 %v401
        %v1413 = vunpack.c.l.b16 %v402
        %v1414 = vunpack.c.l.b16 %v403
        %v1415 = vunpack.c.l.b16 %v404
        %v1416 = vunpack.c.l.b16 %v405
        %v1417 = vunpack.c.l.b16 %v406
        %v1418 = vunpack.c.l.b16 %v407
        %v1419 = vunpack.c.l.b16 %v408
        %v1420 = vunpack.c.l.b16 %v409
        %v1421 = vunpack.c.l.b16 %v410
        %v1422 = vunpack.c.l.b16 %v411
        %v1423 = vunpack.c.l.b16 %v412
        %v1424 = vunpack.c.l.b16 %v413
        %v1425 = vunpack.c.l.b16 %v414
        %v1426 = vunpack.c.l.b16 %v415
        %v1427 = vunpack.c.l.b16 %v416
        %v1428 = vunpack.c.l.b16 %v417
        %v1429 = vunpack.c.l.b16 %v418
        %v1430 = vunpack.c.l.b16 %v419
        %v1431 = vunpack.c.l.b16 %v420
        %v1432 = vunpack.c.l.b16 %v421
        %v1433 = vunpack.c.l.b16 %v422
        %v1434 = vunpack.c.l.b16 %v423
        %v1435 = vunpack.c.l.b16 %v424
        %v1436 = vunpack.c.l.b16 %v425
        %v1437 = vunpack.c.l.b16 %v426
        %v1438 = vunpack.c.l.b16 %v427
        %v1439 = vpack.c.b16 %v1408, %v1407
        %v1440 = vpack.c.b16 %v1410, %v1409
        %v1441 = vpack.c.b16 %v1412, %v1411
        %v1442 = vpack.c.b16 %v1414, %v1413
        %v1443 = vpack.c.b16 %v1416, %v1415
        %v1444 = vpack.c.b16 %v1418, %v1417
        %v1445 = vpack.c.b16 %v1420, %v1419
        %v1446 = vpack.c.b16 %v1422, %v1421
        %v1447 = vpack.c.b16 %v1424, %v1423
        %v1448 = vpack.c.b16 %v1426, %v1425
        %v1449 = vpack.c.b16 %v1428, %v1427
        %v1450 = vpack.c.b16 %v1430, %v1429
        %v1451 = vpack.c.b16 %v1432, %v1431
        %v1452 = vpack.c.b16 %v1434, %v1433
        %v1453 = vpack.c.b16 %v1436, %v1435
        %v1454 = vpack.c.b16 %v1438, %v1437
        %1471 = vmatpush.bf16.msra.mxu0 %v1446
        %1472 = vmatpush.bf16.msra.mxu0 %v1445
        %1473 = vmatpush.bf16.msra.mxu0 %v1444
        %1474 = vmatpush.bf16.msra.mxu0 %v1443
        %1475 = vmatpush.bf16.msra.mxu0 %v1442
        %1476 = vmatpush.bf16.msra.mxu0 %v1441
        %1477 = vmatpush.bf16.msra.mxu0 %v1440
        %1478 = vmatpush.bf16.msra.mxu0 %v1439
        %1479 = vmatmul.bf16.gmra.mxu0 %v1343
        %v1480 = vpop.f32.mrf.mxu0
        %v1481 = vadd.f32 0.0, %v1480
        %v1482 = vpop.f32.mrf.mxu0
        %v1483 = vadd.f32 0.0, %v1482
        %1484 = vmatmul.bf16.gmra.mxu0 %v1345
        %v1485 = vpop.f32.mrf.mxu0
        %v1486 = vadd.f32 0.0, %v1485
        %v1487 = vpop.f32.mrf.mxu0
        %v1488 = vadd.f32 0.0, %v1487
        %1489 = vmatmul.bf16.gmra.mxu0 %v1347
        %v1490 = vpop.f32.mrf.mxu0
        %v1491 = vadd.f32 0.0, %v1490
        %v1492 = vpop.f32.mrf.mxu0
        %v1493 = vadd.f32 0.0, %v1492
        %1494 = vmatmul.bf16.gmra.mxu0 %v1349
        %v1495 = vpop.f32.mrf.mxu0
        %v1496 = vadd.f32 0.0, %v1495
        %v1497 = vpop.f32.mrf.mxu0
        %v1498 = vadd.f32 0.0, %v1497
        %1499 = vmatmul.bf16.gmra.mxu0 %v1351
        %v1500 = vpop.f32.mrf.mxu0
        %v1501 = vadd.f32 0.0, %v1500
        %v1502 = vpop.f32.mrf.mxu0
        %v1503 = vadd.f32 0.0, %v1502
        %1504 = vmatmul.bf16.gmra.mxu0 %v1353
        %v1505 = vpop.f32.mrf.mxu0
        %v1506 = vadd.f32 0.0, %v1505
        %v1507 = vpop.f32.mrf.mxu0
        %v1508 = vadd.f32 0.0, %v1507
        %1509 = vmatmul.bf16.gmra.mxu0 %v1355
        %v1510 = vpop.f32.mrf.mxu0
        %v1511 = vadd.f32 0.0, %v1510
        %v1512 = vpop.f32.mrf.mxu0
        %v1513 = vadd.f32 0.0, %v1512
        %1514 = vmatmul.bf16.gmra.mxu0 %v1357
        %v1515 = vpop.f32.mrf.mxu0
        %v1516 = vadd.f32 0.0, %v1515
        %v1517 = vpop.f32.mrf.mxu0
        %v1518 = vadd.f32 0.0, %v1517
        %1519 = vmatmul.bf16.gmra.mxu0 %v1359
        %v1520 = vpop.f32.mrf.mxu0
        %v1521 = vadd.f32 0.0, %v1520
        %v1522 = vpop.f32.mrf.mxu0
        %v1523 = vadd.f32 0.0, %v1522
        %1524 = vmatmul.bf16.gmra.mxu0 %v1361
        %v1525 = vpop.f32.mrf.mxu0
        %v1526 = vadd.f32 0.0, %v1525
        %v1527 = vpop.f32.mrf.mxu0
        %v1528 = vadd.f32 0.0, %v1527
        %1529 = vmatmul.bf16.gmra.mxu0 %v1363
        %v1530 = vpop.f32.mrf.mxu0
        %v1531 = vadd.f32 0.0, %v1530
        %v1532 = vpop.f32.mrf.mxu0
        %v1533 = vadd.f32 0.0, %v1532
        %1534 = vmatmul.bf16.gmra.mxu0 %v1365
        %v1535 = vpop.f32.mrf.mxu0
        %v1536 = vadd.f32 0.0, %v1535
        %v1537 = vpop.f32.mrf.mxu0
        %v1538 = vadd.f32 0.0, %v1537
        %1539 = vmatmul.bf16.gmra.mxu0 %v1367
        %v1540 = vpop.f32.mrf.mxu0
        %v1541 = vadd.f32 0.0, %v1540
        %v1542 = vpop.f32.mrf.mxu0
        %v1543 = vadd.f32 0.0, %v1542
        %1544 = vmatmul.bf16.gmra.mxu0 %v1369
        %v1545 = vpop.f32.mrf.mxu0
        %v1546 = vadd.f32 0.0, %v1545
        %v1547 = vpop.f32.mrf.mxu0
        %v1548 = vadd.f32 0.0, %v1547
        %1549 = vmatmul.bf16.gmra.mxu0 %v1371
        %v1550 = vpop.f32.mrf.mxu0
        %v1551 = vadd.f32 0.0, %v1550
        %v1552 = vpop.f32.mrf.mxu0
        %v1553 = vadd.f32 0.0, %v1552
        %1554 = vmatmul.bf16.gmra.mxu0 %v1373
        %v1555 = vpop.f32.mrf.mxu0
        %v1556 = vadd.f32 0.0, %v1555
        %v1557 = vpop.f32.mrf.mxu0
        %v1558 = vadd.f32 0.0, %v1557
        %1559 = vdwg.mxu0
        %1560 = vmatpush.bf16.msra.mxu0 %v1454
        %1561 = vmatpush.bf16.msra.mxu0 %v1453
        %1562 = vmatpush.bf16.msra.mxu0 %v1452
        %1563 = vmatpush.bf16.msra.mxu0 %v1451
        %1564 = vmatpush.bf16.msra.mxu0 %v1450
        %1565 = vmatpush.bf16.msra.mxu0 %v1449
        %1566 = vmatpush.bf16.msra.mxu0 %v1448
        %1567 = vmatpush.bf16.msra.mxu0 %v1447
        %1568 = vmatmul.bf16.gmra.mxu0 %v1344
        %v1569 = vpop.f32.mrf.mxu0
        %v1570 = vadd.f32 %v1481, %v1569
        %v1571 = vpop.f32.mrf.mxu0
        %v1572 = vadd.f32 %v1483, %v1571
        %1573 = vmatmul.bf16.gmra.mxu0 %v1346
        %v1574 = vpop.f32.mrf.mxu0
        %v1575 = vadd.f32 %v1486, %v1574
        %v1576 = vpop.f32.mrf.mxu0
        %v1577 = vadd.f32 %v1488, %v1576
        %1578 = vmatmul.bf16.gmra.mxu0 %v1348
        %v1579 = vpop.f32.mrf.mxu0
        %v1580 = vadd.f32 %v1491, %v1579
        %v1581 = vpop.f32.mrf.mxu0
        %v1582 = vadd.f32 %v1493, %v1581
        %1583 = vmatmul.bf16.gmra.mxu0 %v1350
        %v1584 = vpop.f32.mrf.mxu0
        %v1585 = vadd.f32 %v1496, %v1584
        %v1586 = vpop.f32.mrf.mxu0
        %v1587 = vadd.f32 %v1498, %v1586
        %1588 = vmatmul.bf16.gmra.mxu0 %v1352
        %v1589 = vpop.f32.mrf.mxu0
        %v1590 = vadd.f32 %v1501, %v1589
        %v1591 = vpop.f32.mrf.mxu0
        %v1592 = vadd.f32 %v1503, %v1591
        %1593 = vmatmul.bf16.gmra.mxu0 %v1354
        %v1594 = vpop.f32.mrf.mxu0
        %v1595 = vadd.f32 %v1506, %v1594
        %v1596 = vpop.f32.mrf.mxu0
        %v1597 = vadd.f32 %v1508, %v1596
        %1598 = vmatmul.bf16.gmra.mxu0 %v1356
        %v1599 = vpop.f32.mrf.mxu0
        %v1600 = vadd.f32 %v1511, %v1599
        %v1601 = vpop.f32.mrf.mxu0
        %v1602 = vadd.f32 %v1513, %v1601
        %1603 = vmatmul.bf16.gmra.mxu0 %v1358
        %v1604 = vpop.f32.mrf.mxu0
        %v1605 = vadd.f32 %v1516, %v1604
        %v1606 = vpop.f32.mrf.mxu0
        %v1607 = vadd.f32 %v1518, %v1606
        %1608 = vmatmul.bf16.gmra.mxu0 %v1360
        %v1609 = vpop.f32.mrf.mxu0
        %v1610 = vadd.f32 %v1521, %v1609
        %v1611 = vpop.f32.mrf.mxu0
        %v1612 = vadd.f32 %v1523, %v1611
        %1613 = vmatmul.bf16.gmra.mxu0 %v1362
        %v1614 = vpop.f32.mrf.mxu0
        %v1615 = vadd.f32 %v1526, %v1614
        %v1616 = vpop.f32.mrf.mxu0
        %v1617 = vadd.f32 %v1528, %v1616
        %1618 = vmatmul.bf16.gmra.mxu0 %v1364
        %v1619 = vpop.f32.mrf.mxu0
        %v1620 = vadd.f32 %v1531, %v1619
        %v1621 = vpop.f32.mrf.mxu0
        %v1622 = vadd.f32 %v1533, %v1621
        %1623 = vmatmul.bf16.gmra.mxu0 %v1366
        %v1624 = vpop.f32.mrf.mxu0
        %v1625 = vadd.f32 %v1536, %v1624
        %v1626 = vpop.f32.mrf.mxu0
        %v1627 = vadd.f32 %v1538, %v1626
        %1628 = vmatmul.bf16.gmra.mxu0 %v1368
        %v1629 = vpop.f32.mrf.mxu0
        %v1630 = vadd.f32 %v1541, %v1629
        %v1631 = vpop.f32.mrf.mxu0
        %v1632 = vadd.f32 %v1543, %v1631
        %1633 = vmatmul.bf16.gmra.mxu0 %v1370
        %v1634 = vpop.f32.mrf.mxu0
        %v1635 = vadd.f32 %v1546, %v1634
        %v1636 = vpop.f32.mrf.mxu0
        %v1637 = vadd.f32 %v1548, %v1636
        %1638 = vmatmul.bf16.gmra.mxu0 %v1372
        %v1639 = vpop.f32.mrf.mxu0
        %v1640 = vadd.f32 %v1551, %v1639
        %v1641 = vpop.f32.mrf.mxu0
        %v1642 = vadd.f32 %v1553, %v1641
        %1643 = vmatmul.bf16.gmra.mxu0 %v1374
        %v1644 = vpop.f32.mrf.mxu0
        %v1645 = vadd.f32 %v1556, %v1644
        %v1646 = vpop.f32.mrf.mxu0
        %v1647 = vadd.f32 %v1558, %v1646
        %1648 = vdwg.mxu0
        %v1649 = vld [vmem:[#allocation2] sm:$0x1]
        %s1650 = vtos %v1649
        %v1651 = vstv %s1650
        %v1652 = vmul.f32 %v1651, %v1570
        %v1653 = vmul.f32 %v1651, %v1572
        %v1654 = vmul.f32 %v1651, %v1575
        %v1655 = vmul.f32 %v1651, %v1577
        %v1656 = vmul.f32 %v1651, %v1580
        %v1657 = vmul.f32 %v1651, %v1582
        %v1658 = vmul.f32 %v1651, %v1585
        %v1659 = vmul.f32 %v1651, %v1587
        %v1660 = vmul.f32 %v1651, %v1590
        %v1661 = vmul.f32 %v1651, %v1592
        %v1662 = vmul.f32 %v1651, %v1595
        %v1663 = vmul.f32 %v1651, %v1597
        %v1664 = vmul.f32 %v1651, %v1600
        %v1665 = vmul.f32 %v1651, %v1602
        %v1666 = vmul.f32 %v1651, %v1605
        %v1667 = vmul.f32 %v1651, %v1607
        %v1668 = vmul.f32 %v1651, %v1610
        %v1669 = vmul.f32 %v1651, %v1612
        %v1670 = vmul.f32 %v1651, %v1615
        %v1671 = vmul.f32 %v1651, %v1617
        %v1672 = vmul.f32 %v1651, %v1620
        %v1673 = vmul.f32 %v1651, %v1622
        %v1674 = vmul.f32 %v1651, %v1625
        %v1675 = vmul.f32 %v1651, %v1627
        %v1676 = vmul.f32 %v1651, %v1630
        %v1677 = vmul.f32 %v1651, %v1632
        %v1678 = vmul.f32 %v1651, %v1635
        %v1679 = vmul.f32 %v1651, %v1637
        %v1680 = vmul.f32 %v1651, %v1640
        %v1681 = vmul.f32 %v1651, %v1642
        %v1682 = vmul.f32 %v1651, %v1645
        %v1683 = vmul.f32 %v1651, %v1647
        %v1684 = vld [vmem:[%s329] sm:$0xff]
        %v1685 = vld [vmem:[%s329 + $0x8] sm:$0xff]
        %v1686 = vld [vmem:[%s329 + $0x10] sm:$0xff]
        %v1687 = vld [vmem:[%s329 + $0x18] sm:$0xff]
        %v1688 = vld [vmem:[%s329 + $0x20] sm:$0xff]
        %v1689 = vld [vmem:[%s329 + $0x28] sm:$0xff]
        %v1690 = vld [vmem:[%s329 + $0x30] sm:$0xff]
        %v1691 = vld [vmem:[%s329 + $0x38] sm:$0xff]
        %v1692 = vld [vmem:[%s329 + $0x40] sm:$0xff]
        %v1693 = vld [vmem:[%s329 + $0x48] sm:$0xff]
        %v1694 = vld [vmem:[%s329 + $0x50] sm:$0xff]
        %v1695 = vld [vmem:[%s329 + $0x58] sm:$0xff]
        %v1696 = vld [vmem:[%s329 + $0x60] sm:$0xff]
        %v1697 = vld [vmem:[%s329 + $0x68] sm:$0xff]
        %v1698 = vld [vmem:[%s329 + $0x70] sm:$0xff]
        %v1699 = vld [vmem:[%s329 + $0x78] sm:$0xff]
        %v1700 = vld [vmem:[%s329 + $0x80] sm:$0xff]
        %v1701 = vld [vmem:[%s329 + $0x88] sm:$0xff]
        %v1702 = vld [vmem:[%s329 + $0x90] sm:$0xff]
        %v1703 = vld [vmem:[%s329 + $0x98] sm:$0xff]
        %v1704 = vld [vmem:[%s329 + $0xa0] sm:$0xff]
        %v1705 = vld [vmem:[%s329 + $0xa8] sm:$0xff]
        %v1706 = vld [vmem:[%s329 + $0xb0] sm:$0xff]
        %v1707 = vld [vmem:[%s329 + $0xb8] sm:$0xff]
        %v1708 = vld [vmem:[%s329 + $0xc0] sm:$0xff]
        %v1709 = vld [vmem:[%s329 + $0xc8] sm:$0xff]
        %v1710 = vld [vmem:[%s329 + $0xd0] sm:$0xff]
        %v1711 = vld [vmem:[%s329 + $0xd8] sm:$0xff]
        %v1712 = vld [vmem:[%s329 + $0xe0] sm:$0xff]
        %v1713 = vld [vmem:[%s329 + $0xe8] sm:$0xff]
        %v1714 = vld [vmem:[%s329 + $0xf0] sm:$0xff]
        %v1715 = vld [vmem:[%s329 + $0xf8] sm:$0xff]
        %v1716 = vadd.f32 %v1652, %v1684
        %v1717 = vadd.f32 %v1653, %v1685
        %v1718 = vadd.f32 %v1654, %v1686
        %v1719 = vadd.f32 %v1655, %v1687
        %v1720 = vadd.f32 %v1656, %v1688
        %v1721 = vadd.f32 %v1657, %v1689
        %v1722 = vadd.f32 %v1658, %v1690
        %v1723 = vadd.f32 %v1659, %v1691
        %v1724 = vadd.f32 %v1660, %v1692
        %v1725 = vadd.f32 %v1661, %v1693
        %v1726 = vadd.f32 %v1662, %v1694
        %v1727 = vadd.f32 %v1663, %v1695
        %v1728 = vadd.f32 %v1664, %v1696
        %v1729 = vadd.f32 %v1665, %v1697
        %v1730 = vadd.f32 %v1666, %v1698
        %v1731 = vadd.f32 %v1667, %v1699
        %v1732 = vadd.f32 %v1668, %v1700
        %v1733 = vadd.f32 %v1669, %v1701
        %v1734 = vadd.f32 %v1670, %v1702
        %v1735 = vadd.f32 %v1671, %v1703
        %v1736 = vadd.f32 %v1672, %v1704
        %v1737 = vadd.f32 %v1673, %v1705
        %v1738 = vadd.f32 %v1674, %v1706
        %v1739 = vadd.f32 %v1675, %v1707
        %v1740 = vadd.f32 %v1676, %v1708
        %v1741 = vadd.f32 %v1677, %v1709
        %v1742 = vadd.f32 %v1678, %v1710
        %v1743 = vadd.f32 %v1679, %v1711
        %v1744 = vadd.f32 %v1680, %v1712
        %v1745 = vadd.f32 %v1681, %v1713
        %v1746 = vadd.f32 %v1682, %v1714
        %v1747 = vadd.f32 %v1683, %v1715
        %1748 = vst [vmem:[%s300] sm:$0xff] %v1716
        %1749 = vst [vmem:[%s300 + $0x8] sm:$0xff] %v1717
        %1750 = vst [vmem:[%s300 + $0x10] sm:$0xff] %v1718
        %1751 = vst [vmem:[%s300 + $0x18] sm:$0xff] %v1719
        %1752 = vst [vmem:[%s300 + $0x20] sm:$0xff] %v1720
        %1753 = vst [vmem:[%s300 + $0x28] sm:$0xff] %v1721
        %1754 = vst [vmem:[%s300 + $0x30] sm:$0xff] %v1722
        %1755 = vst [vmem:[%s300 + $0x38] sm:$0xff] %v1723
        %1756 = vst [vmem:[%s300 + $0x40] sm:$0xff] %v1724
        %1757 = vst [vmem:[%s300 + $0x48] sm:$0xff] %v1725
        %1758 = vst [vmem:[%s300 + $0x50] sm:$0xff] %v1726
        %1759 = vst [vmem:[%s300 + $0x58] sm:$0xff] %v1727
        %1760 = vst [vmem:[%s300 + $0x60] sm:$0xff] %v1728
        %1761 = vst [vmem:[%s300 + $0x68] sm:$0xff] %v1729
        %1762 = vst [vmem:[%s300 + $0x70] sm:$0xff] %v1730
        %1763 = vst [vmem:[%s300 + $0x78] sm:$0xff] %v1731
        %1764 = vst [vmem:[%s300 + $0x80] sm:$0xff] %v1732
        %1765 = vst [vmem:[%s300 + $0x88] sm:$0xff] %v1733
        %1766 = vst [vmem:[%s300 + $0x90] sm:$0xff] %v1734
        %1767 = vst [vmem:[%s300 + $0x98] sm:$0xff] %v1735
        %1768 = vst [vmem:[%s300 + $0xa0] sm:$0xff] %v1736
        %1769 = vst [vmem:[%s300 + $0xa8] sm:$0xff] %v1737
        %1770 = vst [vmem:[%s300 + $0xb0] sm:$0xff] %v1738
        %1771 = vst [vmem:[%s300 + $0xb8] sm:$0xff] %v1739
        %1772 = vst [vmem:[%s300 + $0xc0] sm:$0xff] %v1740
        %1773 = vst [vmem:[%s300 + $0xc8] sm:$0xff] %v1741
        %1774 = vst [vmem:[%s300 + $0xd0] sm:$0xff] %v1742
        %1775 = vst [vmem:[%s300 + $0xd8] sm:$0xff] %v1743
        %1776 = vst [vmem:[%s300 + $0xe0] sm:$0xff] %v1744
        %1777 = vst [vmem:[%s300 + $0xe8] sm:$0xff] %v1745
        %1778 = vst [vmem:[%s300 + $0xf0] sm:$0xff] %v1746
        %1779 = vst [vmem:[%s300 + $0xf8] sm:$0xff] %v1747
        %s1780 = sand.u32 %s172, 1
        %s1781 = scalar_lea.sflag [#allocation4], %s1780
        %s1782 = sand.u32 %s172, 1
        %s1783 = smul.addr %s1782, 256
        %s1784 = scalar_lea.vmem [#allocation3], %s1783
        // Predicated region
        $region41: #{self_attention.7} parent=39 // pred_check
          %p1785 = pneg %p182
        $region42: #{self_attention.7} parent=39 // pred_check_branch
          %1787 = sbr.rel (%p1785) target = $region44
        $region43: #{self_attention.7} parent=39 // pred_region
          %s1788 = smul.u32 32, %s26
          %1790 = vsyncadd %s1781, 0
          %s1791 = smul.addr %s25, 32
          %s1792 = sadd.s32 %s1788, %s1791
          %s1793 = smul.addr %s1792, 8
          %s1794 = scalar_lea.hbm %s5, %s1793
          %s1795 = sshll.u32 %s1784, 4
          %s1796 = int_to_ptr.vmem [resolvable:$true] %s1795
          %s1797 = sshll.u32 %s1794, 4
          %s1798 = int_to_ptr.hbm [resolvable:$true] %s1797
          %1803 = dma.vmem_to_hbm [thread:$0]  %s1796, 4096, %s1798, %s1781, 128, 128, 8
        $region44: #{self_attention.7} parent=39 // pred_fallthru
          _
      $region40: #{self_attention.7} parent=5 // pred_fallthru
        _
      %p1804 = scmp.le.s32.totalorder 2, %s16
      // Predicated region
      $region45: #{self_attention.7} parent=5 // pred_check
        %p1805 = pneg %p1804
      $region46: #{self_attention.7} parent=5 // pred_check_branch
        %1807 = sbr.rel (%p1805) target = $region48
      $region47: #{self_attention.7} parent=5 // pred_region
        %s1808 = ssub.s32 %s16, 2
        // Predicated region
        $region49: #{self_attention.7} parent=47 // pred_check
          %p1809 = pneg %p188
        $region50: #{self_attention.7} parent=47 // pred_check_branch
          %1811 = sbr.rel (%p1809) target = $region52
        $region51: #{self_attention.7} parent=47 // pred_region
          %s1812 = sand.u32 %s173, 1
          %s1813 = scalar_lea.sflag [#allocation4], %s1812
          %s1814 = sand.u32 %s173, 1
          %s1815 = smul.addr %s1814, 256
          %s1816 = scalar_lea.vmem [#allocation3], %s1815
          %1818 = dma.done %s1813, 4096
        $region52: #{self_attention.7} parent=47 // pred_fallthru
          _
      $region48: #{self_attention.7} parent=5 // pred_fallthru
        _
    $region6: #{self_attention.7} parent=1 // loop_footer
      %s20 = sadd.s32 1, %s16
    $region7: #{self_attention.7} parent=1 // loop_footer_branch
      %15 = sbr.rel target = $region3
    $region8: #{self_attention.7} parent=1 // loop_exit
      _
    %1819 = vsyncpa [#allocation4], 1
    %s1820 = scalar_lea.sflag [#allocation4], 1
    %1821 = vsyncpa %s1820, 1

</llo_original>
